<compile_context>
chip_gen: v7x
topology: tpu7x:2x2x1
jax: 0.10.0
libtpu: 0.0.40
codegen_flags: <defaults>
</compile_context>

<pallas_src>
import functools
import math

import jax
import jax.numpy as jnp
from jax.experimental import pallas as pl
from jax.experimental.pallas import tpu as pltpu

LN_EPS = 1e-5


def _layernorm(x, gamma, beta):
    mean = jnp.mean(x, axis=-1, keepdims=True)
    var = jnp.mean((x - mean) ** 2, axis=-1, keepdims=True)
    return (x - mean) * jax.lax.rsqrt(var + LN_EPS) * gamma + beta


# ---------------------------------------------------------------------------
# Fused encoder-block kernel: one grid step per batch element.
# ---------------------------------------------------------------------------
def _encoder_block_kernel(
    x_ref, wqkv_ref, bqkv_ref, wo_ref, bo_ref, g_ref, b_ref,
    w1_ref, b1_ref, w2_ref, b2_ref,
    out_ref, flat_ref, *, n_heads, head_dim,
):
    H, hd = n_heads, head_dim
    x = x_ref[0]                                     # (S, D) f32
    S, D = x.shape
    bf16 = jnp.bfloat16

    # ---- fused QKV projection: single lane-dense matmul (bf16 MXU, f32 acc) ----
    qkv = jnp.dot(x.astype(bf16), wqkv_ref[...],
                  preferred_element_type=jnp.float32) + bqkv_ref[...]   # (S, 3D)
    q = qkv[:, :D].astype(bf16)
    k = qkv[:, D:2 * D].astype(bf16)
    v = qkv[:, 2 * D:].astype(bf16)

    # ---- per-head attention scores (K=hd underfill is inherent per-head) ----
    scale = 1.0 / math.sqrt(hd)
    scores = jnp.stack(
        [jax.lax.dot_general(
            q[:, h * hd:(h + 1) * hd], k[:, h * hd:(h + 1) * hd],
            dimension_numbers=(((1,), (1,)), ((), ())),
            preferred_element_type=jnp.float32)
         for h in range(H)], axis=0) * scale          # (H, S, S) f32

    # Reference quirk #1: softmax over the HEAD axis (dim=1 of (B, H, S, S)).
    m = jnp.max(scores, axis=0, keepdims=True)
    e = jnp.exp(scores - m)
    attn = e * pl.reciprocal(jnp.sum(e, axis=0, keepdims=True), approx=True)

    # ---- attn @ V per head, written into flat (H*S, hd) scratch ----
    for h in range(H):
        flat_ref[pl.ds(h * S, S), :] = jnp.dot(
            attn[h].astype(bf16), v[:, h * hd:(h + 1) * hd],
            preferred_element_type=jnp.float32)

    # Reference quirk #2: raw (H, S, hd) -> (S, D) reshape (no transpose back).
    # Stride-H row gathers, lane-concatenated in registers (no masked column
    # stores), fed directly to the output projection.
    merged = jnp.concatenate(
        [flat_ref[pl.ds(j, S, stride=H), :] for j in range(H)], axis=-1)  # (S, D)

    gamma = g_ref[...]
    beta = b_ref[...]

    # ---- output projection + residual + LayerNorm ----
    h1 = jnp.dot(merged.astype(bf16), wo_ref[...],
                 preferred_element_type=jnp.float32) + bo_ref[...]
    # dropout: identity (inference)
    y = _layernorm(x + h1, gamma, beta)

    # ---- FFN + residual + LayerNorm ----
    f = jnp.dot(y.astype(bf16), w1_ref[...],
                preferred_element_type=jnp.float32) + b1_ref[...]
    f = jnp.maximum(f, 0.0)                                           # ReLU
    # dropout: identity (inference)
    f = jnp.dot(f.astype(bf16), w2_ref[...],
                preferred_element_type=jnp.float32) + b2_ref[...]
    # dropout: identity (inference)
    out_ref[0] = _layernorm(y + f, gamma, beta)


# ---------------------------------------------------------------------------
# Wrapper: host-side (one-time) weight re-layout + pallas_call
# ---------------------------------------------------------------------------
def encoder_block(x, params, *, n_heads):
    B, S, D = x.shape
    H = n_heads
    assert D % H == 0
    hd = D // H
    F = params["w1"].shape[1]
    bf16 = jnp.bfloat16

    # Lane-dense QKV weight re-layout (done once at load time in a real
    # deployment): columns regrouped to [q(all heads) | k | v], head-contiguous
    # within each D-wide slab, so per-head Q/K/V are lane slices of x @ wqkv.
    w4 = params["w_qkv"].reshape(D, H, 3, hd)
    b3 = params["b_qkv"].reshape(H, 3, hd)
    wqkv = jnp.concatenate([w4[:, :, i, :].reshape(D, D) for i in range(3)],
                           axis=-1).astype(bf16)                  # (D, 3D) bf16
    bqkv = jnp.concatenate([b3[:, i, :].reshape(1, D) for i in range(3)],
                           axis=-1)                               # (1, 3D) f32
    wo = params["w_o"].astype(bf16)
    w1 = params["w1"].astype(bf16)
    w2 = params["w2"].astype(bf16)

    flops = 2 * B * (S * D * 3 * D + 2 * H * S * S * hd + S * D * D + 2 * S * D * F)
    bytes_accessed = (4 * (2 * B * S * D)                 # x in + out (f32)
                      + 2 * (4 * D * D + 2 * D * F)       # bf16 weights
                      + 4 * (6 * D + F))                  # f32 biases / LN params
    cost = pl.CostEstimate(flops=int(flops),
                           transcendentals=int(B * H * S * S),
                           bytes_accessed=int(bytes_accessed))

    kernel = functools.partial(_encoder_block_kernel, n_heads=H, head_dim=hd)
    return pl.pallas_call(
        kernel,
        out_shape=jax.ShapeDtypeStruct((B, S, D), jnp.float32),
        grid=(B,),
        in_specs=[
            pl.BlockSpec((1, S, D), lambda b: (b, 0, 0)),      # x
            pl.BlockSpec((D, 3 * D), lambda b: (0, 0)),        # wqkv (lane-dense)
            pl.BlockSpec((1, 3 * D), lambda b: (0, 0)),        # bqkv
            pl.BlockSpec((D, D), lambda b: (0, 0)),            # w_o
            pl.BlockSpec((1, D), lambda b: (0, 0)),            # b_o
            pl.BlockSpec((1, D), lambda b: (0, 0)),            # gamma
            pl.BlockSpec((1, D), lambda b: (0, 0)),            # beta
            pl.BlockSpec((D, F), lambda b: (0, 0)),            # w1
            pl.BlockSpec((1, F), lambda b: (0, 0)),            # b1
            pl.BlockSpec((F, D), lambda b: (0, 0)),            # w2
            pl.BlockSpec((1, D), lambda b: (0, 0)),            # b2
        ],
        out_specs=pl.BlockSpec((1, S, D), lambda b: (b, 0, 0)),
        scratch_shapes=[
            pltpu.VMEM((H * S, hd), jnp.float32),   # per-head values, flat layout
        ],
        compiler_params=pltpu.CompilerParams(
            dimension_semantics=("parallel",),
            vmem_limit_bytes=64 * 1024 * 1024),
        cost_estimate=cost,
    )(x, wqkv, bqkv, wo, params["b_o"], params["gamma"], params["beta"],
      w1, params["b1"], w2, params["b2"])


# ---------------------------------------------------------------------------
# Pure-JAX reference (mirrors the torch forward, incl. its quirks).
# matmul_dtype controls the matmul-operand precision only (accumulation f32).
# ---------------------------------------------------------------------------
def encoder_block_ref(x, params, *, n_heads, matmul_dtype=jnp.float32):
    B, S, D = x.shape
    hd = D // n_heads
    md = matmul_dtype

    def mm(a, b):
        return jnp.matmul(a.astype(md), b.astype(md),
                          preferred_element_type=jnp.float32)

    qkv = mm(x, params["w_qkv"]) + params["b_qkv"]                   # (B, S, 3D)
    qkv = qkv.reshape(B, S, n_heads, 3 * hd).transpose(0, 2, 1, 3)   # (B, H, S, 3hd)
    Q, K, V = jnp.split(qkv, 3, axis=-1)
    scores = jnp.matmul(Q.astype(md), jnp.swapaxes(K, -1, -2).astype(md),
                        preferred_element_type=jnp.float32) / math.sqrt(hd)
    attn = jax.nn.softmax(scores, axis=1)                            # softmax over heads!
    vals = jnp.matmul(attn.astype(md), V.astype(md),
                      preferred_element_type=jnp.float32)            # (B, H, S, hd)
    vals = vals.reshape(B, S, D)                                     # raw reshape

    def ln(z):
        mean = jnp.mean(z, axis=-1, keepdims=True)
        var = jnp.mean((z - mean) ** 2, axis=-1, keepdims=True)
        return (z - mean) * jax.lax.rsqrt(var + LN_EPS) * params["gamma"] + params["beta"]

    h = mm(vals, params["w_o"]) + params["b_o"]
    y = ln(x + h)
    f = jnp.maximum(mm(y, params["w1"]) + params["b1"], 0.0)
    f = mm(f, params["w2"]) + params["b2"]
    return ln(y + f)


def init_params(key, d_model, hidden_dim):
    ks = jax.random.split(key, 4)

    def lin(k, fan_in, fan_out):
        bound = 1.0 / math.sqrt(fan_in)
        kw, kb = jax.random.split(k)
        w = jax.random.uniform(kw, (fan_in, fan_out), jnp.float32, -bound, bound)
        b = jax.random.uniform(kb, (1, fan_out), jnp.float32, -bound, bound)
        return w, b

    w_qkv, b_qkv = lin(ks[0], d_model, 3 * d_model)
    w_o, b_o = lin(ks[1], d_model, d_model)
    w1, b1 = lin(ks[2], d_model, hidden_dim)
    w2, b2 = lin(ks[3], hidden_dim, d_model)
    return dict(
        w_qkv=w_qkv, b_qkv=b_qkv, w_o=w_o, b_o=b_o,
        w1=w1, b1=b1, w2=w2, b2=b2,
        gamma=jnp.ones((1, d_model), jnp.float32),
        beta=jnp.zeros((1, d_model), jnp.float32),
    )


if __name__ == "__main__":
    # Small shapes consistent with the module (scaled-down BertConfig):
    # batch=2, seq=16, d_model=128, n_heads=8 (head_dim=16), hidden=256.
    B, S, D, H, HID = 2, 16, 128, 8, 256
    key = jax.random.PRNGKey(0)
    kx, kp = jax.random.split(key)
    x = jax.random.normal(kx, (B, S, D), dtype=jnp.float32)
    params = init_params(kp, D, HID)

    fwd = jax.jit(functools.partial(encoder_block, n_heads=H))
    out = jax.block_until_ready(fwd(x, params))
    assert out.shape == (B, S, D)

    # Tight check vs a reference that also uses bf16 matmul operands (f32 accum),
    # plus a looser sanity check vs the plain-f32 reference.
    ref_bf16 = encoder_block_ref(x, params, n_heads=H, matmul_dtype=jnp.bfloat16)
    ref_f32 = encoder_block_ref(x, params, n_heads=H, matmul_dtype=jnp.float32)
    err_b = float(jnp.max(jnp.abs(out - ref_bf16)))
    err_f = float(jnp.max(jnp.abs(out - ref_f32)))
    assert err_b < 2e-2, f"mismatch vs bf16-matmul reference, max abs err = {err_b}"
    assert err_f < 1.5e-1, f"mismatch vs f32 reference, max abs err = {err_f}"
    print("KERNEL_OK")
</pallas_src>

<mosaic_0001>
module attributes {stable_mosaic.version = 11 : i64} {
  func.func @_encoder_block_kernel(%arg0: i32, %arg1: memref<1x16x128xf32, #tpu.memory_space<vmem>>, %arg2: memref<128x384xbf16, #tpu.memory_space<vmem>>, %arg3: memref<1x384xf32, #tpu.memory_space<vmem>>, %arg4: memref<128x128xbf16, #tpu.memory_space<vmem>>, %arg5: memref<1x128xf32, #tpu.memory_space<vmem>>, %arg6: memref<1x128xf32, #tpu.memory_space<vmem>>, %arg7: memref<1x128xf32, #tpu.memory_space<vmem>>, %arg8: memref<128x256xbf16, #tpu.memory_space<vmem>>, %arg9: memref<1x256xf32, #tpu.memory_space<vmem>>, %arg10: memref<256x128xbf16, #tpu.memory_space<vmem>>, %arg11: memref<1x128xf32, #tpu.memory_space<vmem>>, %arg12: memref<1x16x128xf32, #tpu.memory_space<vmem>>, %arg13: memref<128x16xf32, #tpu.memory_space<vmem>>) attributes {dimension_semantics = [#tpu.dimension_semantics<parallel>], iteration_bounds = array<i64: 2>, scalar_prefetch = 0 : i64, scratch_operands = 1 : i64, tpu.core_type = #tpu.core_type<tc>, window_params = [{transform_indices = @transform_0, window_bounds = array<i64: 1, 16, 128>}, {pipeline_mode = #tpu.pipeline_mode<synchronous>, transform_indices = @transform_1, window_bounds = array<i64: 128, 384>}, {pipeline_mode = #tpu.pipeline_mode<synchronous>, transform_indices = @transform_2, window_bounds = array<i64: 1, 384>}, {pipeline_mode = #tpu.pipeline_mode<synchronous>, transform_indices = @transform_3, window_bounds = array<i64: 128, 128>}, {pipeline_mode = #tpu.pipeline_mode<synchronous>, transform_indices = @transform_4, window_bounds = array<i64: 1, 128>}, {pipeline_mode = #tpu.pipeline_mode<synchronous>, transform_indices = @transform_5, window_bounds = array<i64: 1, 128>}, {pipeline_mode = #tpu.pipeline_mode<synchronous>, transform_indices = @transform_6, window_bounds = array<i64: 1, 128>}, {pipeline_mode = #tpu.pipeline_mode<synchronous>, transform_indices = @transform_7, window_bounds = array<i64: 128, 256>}, {pipeline_mode = #tpu.pipeline_mode<synchronous>, transform_indices = @transform_8, window_bounds = array<i64: 1, 256>}, {pipeline_mode = #tpu.pipeline_mode<synchronous>, transform_indices = @transform_9, window_bounds = array<i64: 256, 128>}, {pipeline_mode = #tpu.pipeline_mode<synchronous>, transform_indices = @transform_10, window_bounds = array<i64: 1, 128>}, {transform_indices = @transform_11, window_bounds = array<i64: 1, 16, 128>}]} {
    %c0 = arith.constant 0 : index
    %c0_0 = arith.constant 0 : index
    %c0_1 = arith.constant 0 : index
    %0 = vector.load %arg1[%c0, %c0_0, %c0_1] : memref<1x16x128xf32, #tpu.memory_space<vmem>>, vector<1x16x128xf32>
    %1 = vector.shape_cast %0 : vector<1x16x128xf32> to vector<16x128xf32>
    %2 = arith.truncf %1 : vector<16x128xf32> to vector<16x128xbf16>
    %c0_2 = arith.constant 0 : index
    %c0_3 = arith.constant 0 : index
    %3 = vector.load %arg2[%c0_2, %c0_3] : memref<128x384xbf16, #tpu.memory_space<vmem>>, vector<128x384xbf16>
    %cst = arith.constant dense<0.000000e+00> : vector<16x384xf32>
    %4 = tpu.matmul %2, %3, %cst {dimension_numbers = #tpu.dot_dimension_numbers<[1], [0], [0], [1], [0, 0, 1, 1], [], []>} : vector<16x128xbf16>, vector<128x384xbf16>, vector<16x384xf32> -> vector<16x384xf32>
    %c0_4 = arith.constant 0 : index
    %c0_5 = arith.constant 0 : index
    %5 = vector.load %arg3[%c0_4, %c0_5] : memref<1x384xf32, #tpu.memory_space<vmem>>, vector<1x384xf32>
    %6 = vector.broadcast %5 : vector<1x384xf32> to vector<16x384xf32>
    %7 = arith.addf %4, %6 : vector<16x384xf32>
    %8 = vector.extract_strided_slice %7 {offsets = [0, 0], sizes = [16, 128], strides = [1, 1]} : vector<16x384xf32> to vector<16x128xf32>
    %9 = arith.truncf %8 : vector<16x128xf32> to vector<16x128xbf16>
    %10 = vector.extract_strided_slice %7 {offsets = [0, 128], sizes = [16, 128], strides = [1, 1]} : vector<16x384xf32> to vector<16x128xf32>
    %11 = arith.truncf %10 : vector<16x128xf32> to vector<16x128xbf16>
    %12 = vector.extract_strided_slice %7 {offsets = [0, 256], sizes = [16, 128], strides = [1, 1]} : vector<16x384xf32> to vector<16x128xf32>
    %13 = arith.truncf %12 : vector<16x128xf32> to vector<16x128xbf16>
    %14 = vector.extract_strided_slice %9 {offsets = [0, 0], sizes = [16, 16], strides = [1, 1]} : vector<16x128xbf16> to vector<16x16xbf16>
    %15 = vector.extract_strided_slice %11 {offsets = [0, 0], sizes = [16, 16], strides = [1, 1]} : vector<16x128xbf16> to vector<16x16xbf16>
    %cst_6 = arith.constant dense<0.000000e+00> : vector<16x16xf32>
    %16 = tpu.matmul %14, %15, %cst_6 {dimension_numbers = #tpu.dot_dimension_numbers<[1], [1], [0], [0], [0, 0, 1, 0], [], []>} : vector<16x16xbf16>, vector<16x16xbf16>, vector<16x16xf32> -> vector<16x16xf32>
    %17 = vector.extract_strided_slice %9 {offsets = [0, 16], sizes = [16, 16], strides = [1, 1]} : vector<16x128xbf16> to vector<16x16xbf16>
    %18 = vector.extract_strided_slice %11 {offsets = [0, 16], sizes = [16, 16], strides = [1, 1]} : vector<16x128xbf16> to vector<16x16xbf16>
    %cst_7 = arith.constant dense<0.000000e+00> : vector<16x16xf32>
    %19 = tpu.matmul %17, %18, %cst_7 {dimension_numbers = #tpu.dot_dimension_numbers<[1], [1], [0], [0], [0, 0, 1, 0], [], []>} : vector<16x16xbf16>, vector<16x16xbf16>, vector<16x16xf32> -> vector<16x16xf32>
    %20 = vector.extract_strided_slice %9 {offsets = [0, 32], sizes = [16, 16], strides = [1, 1]} : vector<16x128xbf16> to vector<16x16xbf16>
    %21 = vector.extract_strided_slice %11 {offsets = [0, 32], sizes = [16, 16], strides = [1, 1]} : vector<16x128xbf16> to vector<16x16xbf16>
    %cst_8 = arith.constant dense<0.000000e+00> : vector<16x16xf32>
    %22 = tpu.matmul %20, %21, %cst_8 {dimension_numbers = #tpu.dot_dimension_numbers<[1], [1], [0], [0], [0, 0, 1, 0], [], []>} : vector<16x16xbf16>, vector<16x16xbf16>, vector<16x16xf32> -> vector<16x16xf32>
    %23 = vector.extract_strided_slice %9 {offsets = [0, 48], sizes = [16, 16], strides = [1, 1]} : vector<16x128xbf16> to vector<16x16xbf16>
    %24 = vector.extract_strided_slice %11 {offsets = [0, 48], sizes = [16, 16], strides = [1, 1]} : vector<16x128xbf16> to vector<16x16xbf16>
    %cst_9 = arith.constant dense<0.000000e+00> : vector<16x16xf32>
    %25 = tpu.matmul %23, %24, %cst_9 {dimension_numbers = #tpu.dot_dimension_numbers<[1], [1], [0], [0], [0, 0, 1, 0], [], []>} : vector<16x16xbf16>, vector<16x16xbf16>, vector<16x16xf32> -> vector<16x16xf32>
    %26 = vector.extract_strided_slice %9 {offsets = [0, 64], sizes = [16, 16], strides = [1, 1]} : vector<16x128xbf16> to vector<16x16xbf16>
    %27 = vector.extract_strided_slice %11 {offsets = [0, 64], sizes = [16, 16], strides = [1, 1]} : vector<16x128xbf16> to vector<16x16xbf16>
    %cst_10 = arith.constant dense<0.000000e+00> : vector<16x16xf32>
    %28 = tpu.matmul %26, %27, %cst_10 {dimension_numbers = #tpu.dot_dimension_numbers<[1], [1], [0], [0], [0, 0, 1, 0], [], []>} : vector<16x16xbf16>, vector<16x16xbf16>, vector<16x16xf32> -> vector<16x16xf32>
    %29 = vector.extract_strided_slice %9 {offsets = [0, 80], sizes = [16, 16], strides = [1, 1]} : vector<16x128xbf16> to vector<16x16xbf16>
    %30 = vector.extract_strided_slice %11 {offsets = [0, 80], sizes = [16, 16], strides = [1, 1]} : vector<16x128xbf16> to vector<16x16xbf16>
    %cst_11 = arith.constant dense<0.000000e+00> : vector<16x16xf32>
    %31 = tpu.matmul %29, %30, %cst_11 {dimension_numbers = #tpu.dot_dimension_numbers<[1], [1], [0], [0], [0, 0, 1, 0], [], []>} : vector<16x16xbf16>, vector<16x16xbf16>, vector<16x16xf32> -> vector<16x16xf32>
    %32 = vector.extract_strided_slice %9 {offsets = [0, 96], sizes = [16, 16], strides = [1, 1]} : vector<16x128xbf16> to vector<16x16xbf16>
    %33 = vector.extract_strided_slice %11 {offsets = [0, 96], sizes = [16, 16], strides = [1, 1]} : vector<16x128xbf16> to vector<16x16xbf16>
    %cst_12 = arith.constant dense<0.000000e+00> : vector<16x16xf32>
    %34 = tpu.matmul %32, %33, %cst_12 {dimension_numbers = #tpu.dot_dimension_numbers<[1], [1], [0], [0], [0, 0, 1, 0], [], []>} : vector<16x16xbf16>, vector<16x16xbf16>, vector<16x16xf32> -> vector<16x16xf32>
    %35 = vector.extract_strided_slice %9 {offsets = [0, 112], sizes = [16, 16], strides = [1, 1]} : vector<16x128xbf16> to vector<16x16xbf16>
    %36 = vector.extract_strided_slice %11 {offsets = [0, 112], sizes = [16, 16], strides = [1, 1]} : vector<16x128xbf16> to vector<16x16xbf16>
    %cst_13 = arith.constant dense<0.000000e+00> : vector<16x16xf32>
    %37 = tpu.matmul %35, %36, %cst_13 {dimension_numbers = #tpu.dot_dimension_numbers<[1], [1], [0], [0], [0, 0, 1, 0], [], []>} : vector<16x16xbf16>, vector<16x16xbf16>, vector<16x16xf32> -> vector<16x16xf32>
    %38 = vector.shape_cast %16 : vector<16x16xf32> to vector<1x16x16xf32>
    %39 = vector.shape_cast %19 : vector<16x16xf32> to vector<1x16x16xf32>
    %40 = vector.shape_cast %22 : vector<16x16xf32> to vector<1x16x16xf32>
    %41 = vector.shape_cast %25 : vector<16x16xf32> to vector<1x16x16xf32>
    %42 = vector.shape_cast %28 : vector<16x16xf32> to vector<1x16x16xf32>
    %43 = vector.shape_cast %31 : vector<16x16xf32> to vector<1x16x16xf32>
    %44 = vector.shape_cast %34 : vector<16x16xf32> to vector<1x16x16xf32>
    %45 = vector.shape_cast %37 : vector<16x16xf32> to vector<1x16x16xf32>
    %46 = tpu.concatenate %38, %39, %40, %41, %42, %43, %44, %45 in 0 : vector<1x16x16xf32>, vector<1x16x16xf32>, vector<1x16x16xf32>, vector<1x16x16xf32>, vector<1x16x16xf32>, vector<1x16x16xf32>, vector<1x16x16xf32>, vector<1x16x16xf32> -> vector<8x16x16xf32>
    %cst_14 = arith.constant 2.500000e-01 : f32
    %47 = vector.broadcast %cst_14 : f32 to vector<8x16x16xf32>
    %48 = arith.mulf %46, %47 : vector<8x16x16xf32>
    %cst_15 = arith.constant dense<0xFF800000> : vector<16x16xf32>
    %49 = vector.multi_reduction <maximumf>, %48, %cst_15 [0] : vector<8x16x16xf32> to vector<16x16xf32>
    %50 = vector.shape_cast %49 : vector<16x16xf32> to vector<1x16x16xf32>
    %51 = vector.broadcast %50 : vector<1x16x16xf32> to vector<8x16x16xf32>
    %52 = arith.subf %48, %51 : vector<8x16x16xf32>
    %53 = math.exp %52 : vector<8x16x16xf32>
    %cst_16 = arith.constant dense<0.000000e+00> : vector<16x16xf32>
    %54 = vector.multi_reduction <add>, %53, %cst_16 [0] : vector<8x16x16xf32> to vector<16x16xf32>
    %55 = vector.shape_cast %54 : vector<16x16xf32> to vector<1x16x16xf32>
    %56 = tpu.reciprocal %55 {approx = true} : vector<1x16x16xf32> -> vector<1x16x16xf32>
    %57 = vector.broadcast %56 : vector<1x16x16xf32> to vector<8x16x16xf32>
    %58 = arith.mulf %53, %57 : vector<8x16x16xf32>
    %59 = vector.extract_strided_slice %58 {offsets = [0, 0, 0], sizes = [1, 16, 16], strides = [1, 1, 1]} : vector<8x16x16xf32> to vector<1x16x16xf32>
    %60 = vector.shape_cast %59 : vector<1x16x16xf32> to vector<16x16xf32>
    %61 = arith.truncf %60 : vector<16x16xf32> to vector<16x16xbf16>
    %62 = vector.extract_strided_slice %13 {offsets = [0, 0], sizes = [16, 16], strides = [1, 1]} : vector<16x128xbf16> to vector<16x16xbf16>
    %cst_17 = arith.constant dense<0.000000e+00> : vector<16x16xf32>
    %63 = tpu.matmul %61, %62, %cst_17 {dimension_numbers = #tpu.dot_dimension_numbers<[1], [0], [0], [1], [0, 0, 1, 1], [], []>} : vector<16x16xbf16>, vector<16x16xbf16>, vector<16x16xf32> -> vector<16x16xf32>
    %c0_18 = arith.constant 0 : index
    %c0_19 = arith.constant 0 : index
    %64 = vector.load %arg13[%c0_18, %c0_19] : memref<128x16xf32, #tpu.memory_space<vmem>>, vector<16x16xf32>
    tpu.vector_store %arg13[%c0_18, %c0_19], %63 {strides = array<i32>} : memref<128x16xf32, #tpu.memory_space<vmem>>, vector<16x16xf32>,
    %65 = vector.extract_strided_slice %58 {offsets = [1, 0, 0], sizes = [1, 16, 16], strides = [1, 1, 1]} : vector<8x16x16xf32> to vector<1x16x16xf32>
    %66 = vector.shape_cast %65 : vector<1x16x16xf32> to vector<16x16xf32>
    %67 = arith.truncf %66 : vector<16x16xf32> to vector<16x16xbf16>
    %68 = vector.extract_strided_slice %13 {offsets = [0, 16], sizes = [16, 16], strides = [1, 1]} : vector<16x128xbf16> to vector<16x16xbf16>
    %cst_20 = arith.constant dense<0.000000e+00> : vector<16x16xf32>
    %69 = tpu.matmul %67, %68, %cst_20 {dimension_numbers = #tpu.dot_dimension_numbers<[1], [0], [0], [1], [0, 0, 1, 1], [], []>} : vector<16x16xbf16>, vector<16x16xbf16>, vector<16x16xf32> -> vector<16x16xf32>
    %c16 = arith.constant 16 : index
    %c0_21 = arith.constant 0 : index
    %70 = vector.load %arg13[%c16, %c0_21] : memref<128x16xf32, #tpu.memory_space<vmem>>, vector<16x16xf32>
    tpu.vector_store %arg13[%c16, %c0_21], %69 {strides = array<i32>} : memref<128x16xf32, #tpu.memory_space<vmem>>, vector<16x16xf32>,
    %71 = vector.extract_strided_slice %58 {offsets = [2, 0, 0], sizes = [1, 16, 16], strides = [1, 1, 1]} : vector<8x16x16xf32> to vector<1x16x16xf32>
    %72 = vector.shape_cast %71 : vector<1x16x16xf32> to vector<16x16xf32>
    %73 = arith.truncf %72 : vector<16x16xf32> to vector<16x16xbf16>
    %74 = vector.extract_strided_slice %13 {offsets = [0, 32], sizes = [16, 16], strides = [1, 1]} : vector<16x128xbf16> to vector<16x16xbf16>
    %cst_22 = arith.constant dense<0.000000e+00> : vector<16x16xf32>
    %75 = tpu.matmul %73, %74, %cst_22 {dimension_numbers = #tpu.dot_dimension_numbers<[1], [0], [0], [1], [0, 0, 1, 1], [], []>} : vector<16x16xbf16>, vector<16x16xbf16>, vector<16x16xf32> -> vector<16x16xf32>
    %c32 = arith.constant 32 : index
    %c0_23 = arith.constant 0 : index
    %76 = vector.load %arg13[%c32, %c0_23] : memref<128x16xf32, #tpu.memory_space<vmem>>, vector<16x16xf32>
    tpu.vector_store %arg13[%c32, %c0_23], %75 {strides = array<i32>} : memref<128x16xf32, #tpu.memory_space<vmem>>, vector<16x16xf32>,
    %77 = vector.extract_strided_slice %58 {offsets = [3, 0, 0], sizes = [1, 16, 16], strides = [1, 1, 1]} : vector<8x16x16xf32> to vector<1x16x16xf32>
    %78 = vector.shape_cast %77 : vector<1x16x16xf32> to vector<16x16xf32>
    %79 = arith.truncf %78 : vector<16x16xf32> to vector<16x16xbf16>
    %80 = vector.extract_strided_slice %13 {offsets = [0, 48], sizes = [16, 16], strides = [1, 1]} : vector<16x128xbf16> to vector<16x16xbf16>
    %cst_24 = arith.constant dense<0.000000e+00> : vector<16x16xf32>
    %81 = tpu.matmul %79, %80, %cst_24 {dimension_numbers = #tpu.dot_dimension_numbers<[1], [0], [0], [1], [0, 0, 1, 1], [], []>} : vector<16x16xbf16>, vector<16x16xbf16>, vector<16x16xf32> -> vector<16x16xf32>
    %c48 = arith.constant 48 : index
    %c0_25 = arith.constant 0 : index
    %82 = vector.load %arg13[%c48, %c0_25] : memref<128x16xf32, #tpu.memory_space<vmem>>, vector<16x16xf32>
    tpu.vector_store %arg13[%c48, %c0_25], %81 {strides = array<i32>} : memref<128x16xf32, #tpu.memory_space<vmem>>, vector<16x16xf32>,
    %83 = vector.extract_strided_slice %58 {offsets = [4, 0, 0], sizes = [1, 16, 16], strides = [1, 1, 1]} : vector<8x16x16xf32> to vector<1x16x16xf32>
    %84 = vector.shape_cast %83 : vector<1x16x16xf32> to vector<16x16xf32>
    %85 = arith.truncf %84 : vector<16x16xf32> to vector<16x16xbf16>
    %86 = vector.extract_strided_slice %13 {offsets = [0, 64], sizes = [16, 16], strides = [1, 1]} : vector<16x128xbf16> to vector<16x16xbf16>
    %cst_26 = arith.constant dense<0.000000e+00> : vector<16x16xf32>
    %87 = tpu.matmul %85, %86, %cst_26 {dimension_numbers = #tpu.dot_dimension_numbers<[1], [0], [0], [1], [0, 0, 1, 1], [], []>} : vector<16x16xbf16>, vector<16x16xbf16>, vector<16x16xf32> -> vector<16x16xf32>
    %c64 = arith.constant 64 : index
    %c0_27 = arith.constant 0 : index
    %88 = vector.load %arg13[%c64, %c0_27] : memref<128x16xf32, #tpu.memory_space<vmem>>, vector<16x16xf32>
    tpu.vector_store %arg13[%c64, %c0_27], %87 {strides = array<i32>} : memref<128x16xf32, #tpu.memory_space<vmem>>, vector<16x16xf32>,
    %89 = vector.extract_strided_slice %58 {offsets = [5, 0, 0], sizes = [1, 16, 16], strides = [1, 1, 1]} : vector<8x16x16xf32> to vector<1x16x16xf32>
    %90 = vector.shape_cast %89 : vector<1x16x16xf32> to vector<16x16xf32>
    %91 = arith.truncf %90 : vector<16x16xf32> to vector<16x16xbf16>
    %92 = vector.extract_strided_slice %13 {offsets = [0, 80], sizes = [16, 16], strides = [1, 1]} : vector<16x128xbf16> to vector<16x16xbf16>
    %cst_28 = arith.constant dense<0.000000e+00> : vector<16x16xf32>
    %93 = tpu.matmul %91, %92, %cst_28 {dimension_numbers = #tpu.dot_dimension_numbers<[1], [0], [0], [1], [0, 0, 1, 1], [], []>} : vector<16x16xbf16>, vector<16x16xbf16>, vector<16x16xf32> -> vector<16x16xf32>
    %c80 = arith.constant 80 : index
    %c0_29 = arith.constant 0 : index
    %94 = vector.load %arg13[%c80, %c0_29] : memref<128x16xf32, #tpu.memory_space<vmem>>, vector<16x16xf32>
    tpu.vector_store %arg13[%c80, %c0_29], %93 {strides = array<i32>} : memref<128x16xf32, #tpu.memory_space<vmem>>, vector<16x16xf32>,
    %95 = vector.extract_strided_slice %58 {offsets = [6, 0, 0], sizes = [1, 16, 16], strides = [1, 1, 1]} : vector<8x16x16xf32> to vector<1x16x16xf32>
    %96 = vector.shape_cast %95 : vector<1x16x16xf32> to vector<16x16xf32>
    %97 = arith.truncf %96 : vector<16x16xf32> to vector<16x16xbf16>
    %98 = vector.extract_strided_slice %13 {offsets = [0, 96], sizes = [16, 16], strides = [1, 1]} : vector<16x128xbf16> to vector<16x16xbf16>
    %cst_30 = arith.constant dense<0.000000e+00> : vector<16x16xf32>
    %99 = tpu.matmul %97, %98, %cst_30 {dimension_numbers = #tpu.dot_dimension_numbers<[1], [0], [0], [1], [0, 0, 1, 1], [], []>} : vector<16x16xbf16>, vector<16x16xbf16>, vector<16x16xf32> -> vector<16x16xf32>
    %c96 = arith.constant 96 : index
    %c0_31 = arith.constant 0 : index
    %100 = vector.load %arg13[%c96, %c0_31] : memref<128x16xf32, #tpu.memory_space<vmem>>, vector<16x16xf32>
    tpu.vector_store %arg13[%c96, %c0_31], %99 {strides = array<i32>} : memref<128x16xf32, #tpu.memory_space<vmem>>, vector<16x16xf32>,
    %101 = vector.extract_strided_slice %58 {offsets = [7, 0, 0], sizes = [1, 16, 16], strides = [1, 1, 1]} : vector<8x16x16xf32> to vector<1x16x16xf32>
    %102 = vector.shape_cast %101 : vector<1x16x16xf32> to vector<16x16xf32>
    %103 = arith.truncf %102 : vector<16x16xf32> to vector<16x16xbf16>
    %104 = vector.extract_strided_slice %13 {offsets = [0, 112], sizes = [16, 16], strides = [1, 1]} : vector<16x128xbf16> to vector<16x16xbf16>
    %cst_32 = arith.constant dense<0.000000e+00> : vector<16x16xf32>
    %105 = tpu.matmul %103, %104, %cst_32 {dimension_numbers = #tpu.dot_dimension_numbers<[1], [0], [0], [1], [0, 0, 1, 1], [], []>} : vector<16x16xbf16>, vector<16x16xbf16>, vector<16x16xf32> -> vector<16x16xf32>
    %c112 = arith.constant 112 : index
    %c0_33 = arith.constant 0 : index
    %106 = vector.load %arg13[%c112, %c0_33] : memref<128x16xf32, #tpu.memory_space<vmem>>, vector<16x16xf32>
    tpu.vector_store %arg13[%c112, %c0_33], %105 {strides = array<i32>} : memref<128x16xf32, #tpu.memory_space<vmem>>, vector<16x16xf32>,
    %c0_34 = arith.constant 0 : index
    %c0_35 = arith.constant 0 : index
    %107 = tpu.strided_load %arg13[%c0_34, %c0_35] {strides = array<i32: 8, 1>} : memref<128x16xf32, #tpu.memory_space<vmem>>, vector<16x16xf32>
    %c1 = arith.constant 1 : index
    %c0_36 = arith.constant 0 : index
    %108 = tpu.strided_load %arg13[%c1, %c0_36] {strides = array<i32: 8, 1>} : memref<128x16xf32, #tpu.memory_space<vmem>>, vector<16x16xf32>
    %c2 = arith.constant 2 : index
    %c0_37 = arith.constant 0 : index
    %109 = tpu.strided_load %arg13[%c2, %c0_37] {strides = array<i32: 8, 1>} : memref<128x16xf32, #tpu.memory_space<vmem>>, vector<16x16xf32>
    %c3 = arith.constant 3 : index
    %c0_38 = arith.constant 0 : index
    %110 = tpu.strided_load %arg13[%c3, %c0_38] {strides = array<i32: 8, 1>} : memref<128x16xf32, #tpu.memory_space<vmem>>, vector<16x16xf32>
    %c4 = arith.constant 4 : index
    %c0_39 = arith.constant 0 : index
    %111 = tpu.strided_load %arg13[%c4, %c0_39] {strides = array<i32: 8, 1>} : memref<128x16xf32, #tpu.memory_space<vmem>>, vector<16x16xf32>
    %c5 = arith.constant 5 : index
    %c0_40 = arith.constant 0 : index
    %112 = tpu.strided_load %arg13[%c5, %c0_40] {strides = array<i32: 8, 1>} : memref<128x16xf32, #tpu.memory_space<vmem>>, vector<16x16xf32>
    %c6 = arith.constant 6 : index
    %c0_41 = arith.constant 0 : index
    %113 = tpu.strided_load %arg13[%c6, %c0_41] {strides = array<i32: 8, 1>} : memref<128x16xf32, #tpu.memory_space<vmem>>, vector<16x16xf32>
    %c7 = arith.constant 7 : index
    %c0_42 = arith.constant 0 : index
    %114 = tpu.strided_load %arg13[%c7, %c0_42] {strides = array<i32: 8, 1>} : memref<128x16xf32, #tpu.memory_space<vmem>>, vector<16x16xf32>
    %115 = tpu.concatenate %107, %108, %109, %110, %111, %112, %113, %114 in 1 : vector<16x16xf32>, vector<16x16xf32>, vector<16x16xf32>, vector<16x16xf32>, vector<16x16xf32>, vector<16x16xf32>, vector<16x16xf32>, vector<16x16xf32> -> vector<16x128xf32>
    %c0_43 = arith.constant 0 : index
    %c0_44 = arith.constant 0 : index
    %116 = vector.load %arg6[%c0_43, %c0_44] : memref<1x128xf32, #tpu.memory_space<vmem>>, vector<1x128xf32>
    %c0_45 = arith.constant 0 : index
    %c0_46 = arith.constant 0 : index
    %117 = vector.load %arg7[%c0_45, %c0_46] : memref<1x128xf32, #tpu.memory_space<vmem>>, vector<1x128xf32>
    %118 = arith.truncf %115 : vector<16x128xf32> to vector<16x128xbf16>
    %c0_47 = arith.constant 0 : index
    %c0_48 = arith.constant 0 : index
    %119 = vector.load %arg4[%c0_47, %c0_48] : memref<128x128xbf16, #tpu.memory_space<vmem>>, vector<128x128xbf16>
    %cst_49 = arith.constant dense<0.000000e+00> : vector<16x128xf32>
    %120 = tpu.matmul %118, %119, %cst_49 {dimension_numbers = #tpu.dot_dimension_numbers<[1], [0], [0], [1], [0, 0, 1, 1], [], []>} : vector<16x128xbf16>, vector<128x128xbf16>, vector<16x128xf32> -> vector<16x128xf32>
    %c0_50 = arith.constant 0 : index
    %c0_51 = arith.constant 0 : index
    %121 = vector.load %arg5[%c0_50, %c0_51] : memref<1x128xf32, #tpu.memory_space<vmem>>, vector<1x128xf32>
    %122 = vector.broadcast %121 : vector<1x128xf32> to vector<16x128xf32>
    %123 = arith.addf %120, %122 : vector<16x128xf32>
    %124 = arith.addf %1, %123 : vector<16x128xf32>
    %cst_52 = arith.constant dense<0.000000e+00> : vector<16xf32>
    %125 = vector.multi_reduction <add>, %124, %cst_52 [1] : vector<16x128xf32> to vector<16xf32>
    %126 = vector.shape_cast %125 : vector<16xf32> to vector<16x1xf32>
    %cst_53 = arith.constant 1.280000e+02 : f32
    %127 = vector.broadcast %cst_53 : f32 to vector<16x1xf32>
    %128 = arith.divf %126, %127 : vector<16x1xf32>
    %129 = vector.broadcast %128 : vector<16x1xf32> to vector<16x128xf32>
    %130 = arith.subf %124, %129 : vector<16x128xf32>
    %131 = arith.mulf %130, %130 : vector<16x128xf32>
    %cst_54 = arith.constant dense<0.000000e+00> : vector<16xf32>
    %132 = vector.multi_reduction <add>, %131, %cst_54 [1] : vector<16x128xf32> to vector<16xf32>
    %133 = vector.shape_cast %132 : vector<16xf32> to vector<16x1xf32>
    %cst_55 = arith.constant 1.280000e+02 : f32
    %134 = vector.broadcast %cst_55 : f32 to vector<16x1xf32>
    %135 = arith.divf %133, %134 : vector<16x1xf32>
    %136 = vector.broadcast %128 : vector<16x1xf32> to vector<16x128xf32>
    %137 = arith.subf %124, %136 : vector<16x128xf32>
    %cst_56 = arith.constant 9.99999974E-6 : f32
    %138 = vector.broadcast %cst_56 : f32 to vector<16x1xf32>
    %139 = arith.addf %135, %138 : vector<16x1xf32>
    %140 = math.rsqrt %139 : vector<16x1xf32>
    %141 = vector.broadcast %140 : vector<16x1xf32> to vector<16x128xf32>
    %142 = arith.mulf %137, %141 : vector<16x128xf32>
    %143 = vector.broadcast %116 : vector<1x128xf32> to vector<16x128xf32>
    %144 = arith.mulf %142, %143 : vector<16x128xf32>
    %145 = vector.broadcast %117 : vector<1x128xf32> to vector<16x128xf32>
    %146 = arith.addf %144, %145 : vector<16x128xf32>
    %147 = arith.truncf %146 : vector<16x128xf32> to vector<16x128xbf16>
    %c0_57 = arith.constant 0 : index
    %c0_58 = arith.constant 0 : index
    %148 = vector.load %arg8[%c0_57, %c0_58] : memref<128x256xbf16, #tpu.memory_space<vmem>>, vector<128x256xbf16>
    %cst_59 = arith.constant dense<0.000000e+00> : vector<16x256xf32>
    %149 = tpu.matmul %147, %148, %cst_59 {dimension_numbers = #tpu.dot_dimension_numbers<[1], [0], [0], [1], [0, 0, 1, 1], [], []>} : vector<16x128xbf16>, vector<128x256xbf16>, vector<16x256xf32> -> vector<16x256xf32>
    %c0_60 = arith.constant 0 : index
    %c0_61 = arith.constant 0 : index
    %150 = vector.load %arg9[%c0_60, %c0_61] : memref<1x256xf32, #tpu.memory_space<vmem>>, vector<1x256xf32>
    %151 = vector.broadcast %150 : vector<1x256xf32> to vector<16x256xf32>
    %152 = arith.addf %149, %151 : vector<16x256xf32>
    %cst_62 = arith.constant 0.000000e+00 : f32
    %153 = vector.broadcast %cst_62 : f32 to vector<16x256xf32>
    %154 = arith.maximumf %152, %153 : vector<16x256xf32>
    %155 = arith.truncf %154 : vector<16x256xf32> to vector<16x256xbf16>
    %c0_63 = arith.constant 0 : index
    %c0_64 = arith.constant 0 : index
    %156 = vector.load %arg10[%c0_63, %c0_64] : memref<256x128xbf16, #tpu.memory_space<vmem>>, vector<256x128xbf16>
    %cst_65 = arith.constant dense<0.000000e+00> : vector<16x128xf32>
    %157 = tpu.matmul %155, %156, %cst_65 {dimension_numbers = #tpu.dot_dimension_numbers<[1], [0], [0], [1], [0, 0, 1, 1], [], []>} : vector<16x256xbf16>, vector<256x128xbf16>, vector<16x128xf32> -> vector<16x128xf32>
    %c0_66 = arith.constant 0 : index
    %c0_67 = arith.constant 0 : index
    %158 = vector.load %arg11[%c0_66, %c0_67] : memref<1x128xf32, #tpu.memory_space<vmem>>, vector<1x128xf32>
    %159 = vector.broadcast %158 : vector<1x128xf32> to vector<16x128xf32>
    %160 = arith.addf %157, %159 : vector<16x128xf32>
    %161 = arith.addf %146, %160 : vector<16x128xf32>
    %cst_68 = arith.constant dense<0.000000e+00> : vector<16xf32>
    %162 = vector.multi_reduction <add>, %161, %cst_68 [1] : vector<16x128xf32> to vector<16xf32>
    %163 = vector.shape_cast %162 : vector<16xf32> to vector<16x1xf32>
    %cst_69 = arith.constant 1.280000e+02 : f32
    %164 = vector.broadcast %cst_69 : f32 to vector<16x1xf32>
    %165 = arith.divf %163, %164 : vector<16x1xf32>
    %166 = vector.broadcast %165 : vector<16x1xf32> to vector<16x128xf32>
    %167 = arith.subf %161, %166 : vector<16x128xf32>
    %168 = arith.mulf %167, %167 : vector<16x128xf32>
    %cst_70 = arith.constant dense<0.000000e+00> : vector<16xf32>
    %169 = vector.multi_reduction <add>, %168, %cst_70 [1] : vector<16x128xf32> to vector<16xf32>
    %170 = vector.shape_cast %169 : vector<16xf32> to vector<16x1xf32>
    %cst_71 = arith.constant 1.280000e+02 : f32
    %171 = vector.broadcast %cst_71 : f32 to vector<16x1xf32>
    %172 = arith.divf %170, %171 : vector<16x1xf32>
    %173 = vector.broadcast %165 : vector<16x1xf32> to vector<16x128xf32>
    %174 = arith.subf %161, %173 : vector<16x128xf32>
    %cst_72 = arith.constant 9.99999974E-6 : f32
    %175 = vector.broadcast %cst_72 : f32 to vector<16x1xf32>
    %176 = arith.addf %172, %175 : vector<16x1xf32>
    %177 = math.rsqrt %176 : vector<16x1xf32>
    %178 = vector.broadcast %177 : vector<16x1xf32> to vector<16x128xf32>
    %179 = arith.mulf %174, %178 : vector<16x128xf32>
    %180 = vector.broadcast %116 : vector<1x128xf32> to vector<16x128xf32>
    %181 = arith.mulf %179, %180 : vector<16x128xf32>
    %182 = vector.broadcast %117 : vector<1x128xf32> to vector<16x128xf32>
    %183 = arith.addf %181, %182 : vector<16x128xf32>
    %c0_73 = arith.constant 0 : index
    %c0_74 = arith.constant 0 : index
    %c0_75 = arith.constant 0 : index
    %184 = vector.load %arg12[%c0_73, %c0_74, %c0_75] : memref<1x16x128xf32, #tpu.memory_space<vmem>>, vector<1x16x128xf32>
    %185 = vector.shape_cast %184 : vector<1x16x128xf32> to vector<16x128xf32>
    %186 = vector.shape_cast %183 : vector<16x128xf32> to vector<1x16x128xf32>
    tpu.vector_store %arg12[%c0_73, %c0_74, %c0_75], %186 {strides = array<i32>} : memref<1x16x128xf32, #tpu.memory_space<vmem>>, vector<1x16x128xf32>,
    return
  }
  func.func @transform_0(%arg0: i32) -> (i32, i32, i32) {
    %c0_i32 = arith.constant 0 : i32
    %c0_i32_0 = arith.constant 0 : i32
    %c0_i32_1 = arith.constant 0 : i32
    return %arg0, %c0_i32, %c0_i32_0 : i32, i32, i32
  }
  func.func @transform_1(%arg0: i32) -> (i32, i32) {
    %c0_i32 = arith.constant 0 : i32
    %c0_i32_0 = arith.constant 0 : i32
    %c0_i32_1 = arith.constant 0 : i32
    return %c0_i32, %c0_i32_0 : i32, i32
  }
  func.func @transform_2(%arg0: i32) -> (i32, i32) {
    %c0_i32 = arith.constant 0 : i32
    %c0_i32_0 = arith.constant 0 : i32
    %c0_i32_1 = arith.constant 0 : i32
    return %c0_i32, %c0_i32_0 : i32, i32
  }
  func.func @transform_3(%arg0: i32) -> (i32, i32) {
    %c0_i32 = arith.constant 0 : i32
    %c0_i32_0 = arith.constant 0 : i32
    %c0_i32_1 = arith.constant 0 : i32
    return %c0_i32, %c0_i32_0 : i32, i32
  }
  func.func @transform_4(%arg0: i32) -> (i32, i32) {
    %c0_i32 = arith.constant 0 : i32
    %c0_i32_0 = arith.constant 0 : i32
    %c0_i32_1 = arith.constant 0 : i32
    return %c0_i32, %c0_i32_0 : i32, i32
  }
  func.func @transform_5(%arg0: i32) -> (i32, i32) {
    %c0_i32 = arith.constant 0 : i32
    %c0_i32_0 = arith.constant 0 : i32
    %c0_i32_1 = arith.constant 0 : i32
    return %c0_i32, %c0_i32_0 : i32, i32
  }
  func.func @transform_6(%arg0: i32) -> (i32, i32) {
    %c0_i32 = arith.constant 0 : i32
    %c0_i32_0 = arith.constant 0 : i32
    %c0_i32_1 = arith.constant 0 : i32
    return %c0_i32, %c0_i32_0 : i32, i32
  }
  func.func @transform_7(%arg0: i32) -> (i32, i32) {
    %c0_i32 = arith.constant 0 : i32
    %c0_i32_0 = arith.constant 0 : i32
    %c0_i32_1 = arith.constant 0 : i32
    return %c0_i32, %c0_i32_0 : i32, i32
  }
  func.func @transform_8(%arg0: i32) -> (i32, i32) {
    %c0_i32 = arith.constant 0 : i32
    %c0_i32_0 = arith.constant 0 : i32
    %c0_i32_1 = arith.constant 0 : i32
    return %c0_i32, %c0_i32_0 : i32, i32
  }
  func.func @transform_9(%arg0: i32) -> (i32, i32) {
    %c0_i32 = arith.constant 0 : i32
    %c0_i32_0 = arith.constant 0 : i32
    %c0_i32_1 = arith.constant 0 : i32
    return %c0_i32, %c0_i32_0 : i32, i32
  }
  func.func @transform_10(%arg0: i32) -> (i32, i32) {
    %c0_i32 = arith.constant 0 : i32
    %c0_i32_0 = arith.constant 0 : i32
    %c0_i32_1 = arith.constant 0 : i32
    return %c0_i32, %c0_i32_0 : i32, i32
  }
  func.func @transform_11(%arg0: i32) -> (i32, i32, i32) {
    %c0_i32 = arith.constant 0 : i32
    %c0_i32_0 = arith.constant 0 : i32
    %c0_i32_1 = arith.constant 0 : i32
    return %arg0, %c0_i32, %c0_i32_0 : i32, i32, i32
  }
}

</mosaic_0001>

<llo_original>
// kernel: squeeze.10
$region0: #{squeeze.10}
  %s0 = inlined_call_operand.vmem [shape: f32[8,16], index: 0, kind: input, shape index: {}]
  %s1 = inlined_call_operand.vmem [shape: f32[1,128], index: 1, kind: output, shape index: {}]
  $region1: #{squeeze.10} parent=0
    #allocation0 [shape = 'u8[4096]{0}', space=vmem, size = 0x1000, scoped, tag = 'scoped mem for output reshape']
    %v2 = vld [vmem:[%s0] sm:$0x1]
    %vm3 = vcmask 130048
    %4 = vst.msk [vmem:[#allocation0] sm:$0x1] %vm3, %v2
    %s5 = scalar_lea.vmem %s0, 7
    %v6 = vld [vmem:[%s5] sm:$0x1]
    %7 = vrot.lane.b32.xlu0 %v6, 112
    %v8 = vpop.permute.xlu0 %7
    %vm9 = vcmask 1048448
    %10 = vst.msk [vmem:[#allocation0] sm:$0x1] %vm9, %v8
    %s11 = scalar_lea.vmem %s0, 6
    %v12 = vld [vmem:[%s11] sm:$0x1]
    %13 = vrot.lane.b32.xlu0 %v12, 96
    %v14 = vpop.permute.xlu0 %13
    %vm15 = vcmask 917248
    %16 = vst.msk [vmem:[#allocation0] sm:$0x1] %vm15, %v14
    %s17 = scalar_lea.vmem %s0, 5
    %v18 = vld [vmem:[%s17] sm:$0x1]
    %19 = vrot.lane.b32.xlu0 %v18, 80
    %v20 = vpop.permute.xlu0 %19
    %vm21 = vcmask 786048
    %22 = vst.msk [vmem:[#allocation0] sm:$0x1] %vm21, %v20
    %s23 = scalar_lea.vmem %s0, 4
    %v24 = vld [vmem:[%s23] sm:$0x1]
    %25 = vrot.lane.b32.xlu0 %v24, 64
    %v26 = vpop.permute.xlu0 %25
    %vm27 = vcmask 654848
    %28 = vst.msk [vmem:[#allocation0] sm:$0x1] %vm27, %v26
    %s29 = scalar_lea.vmem %s0, 3
    %v30 = vld [vmem:[%s29] sm:$0x1]
    %31 = vrot.lane.b32.xlu0 %v30, 48
    %v32 = vpop.permute.xlu0 %31
    %vm33 = vcmask 523648
    %34 = vst.msk [vmem:[#allocation0] sm:$0x1] %vm33, %v32
    %s35 = scalar_lea.vmem %s0, 2
    %v36 = vld [vmem:[%s35] sm:$0x1]
    %37 = vrot.lane.b32.xlu0 %v36, 32
    %v38 = vpop.permute.xlu0 %37
    %vm39 = vcmask 392448
    %40 = vst.msk [vmem:[#allocation0] sm:$0x1] %vm39, %v38
    %s41 = scalar_lea.vmem %s0, 1
    %v42 = vld [vmem:[%s41] sm:$0x1]
    %43 = vrot.lane.b32.xlu0 %v42, 16
    %v44 = vpop.permute.xlu0 %43
    %vm45 = vcmask 261248
    %46 = vst.msk [vmem:[#allocation0] sm:$0x1] %vm45, %v44
    %s48 = sshllo.u32 0, 1
    %v50 = vld [vmem:[#allocation0] sm:%s48]
    %s51 = sshllo.u32 0, 1
    %52 = vst [vmem:[%s1] sm:%s51] %v50

// kernel: encoder_block.1
$region0: #{encoder_block.1}
  #allocation0 [shape = 'u32[]', space=smem, size = 0x4, offset = 0x4, fixed_abs, tag = 'smem constant byte address 0x4 - core index']
  #allocation1 [shape = 'u32[144,128]{1,0:T(1,128)}', space=vmem, size = 0x12000, scoped, tag = 'internal scratch']
  #allocation2 [shape = 'f32[128,16]{1,0:T(8,128)}', space=vmem, size = 0x10000, scoped, tag = 'scratch operand']
  %s0 = inlined_call_operand.hbm [shape: f32[2,16,128], index: 0, kind: input, shape index: {}]
  %s1 = inlined_call_operand.hbm [shape: bf16[128,384], index: 1, kind: input, shape index: {}]
  %s2 = inlined_call_operand.hbm [shape: f32[1,384], index: 2, kind: input, shape index: {}]
  %s3 = inlined_call_operand.hbm [shape: bf16[128,128], index: 3, kind: input, shape index: {}]
  %s4 = inlined_call_operand.hbm [shape: f32[1,128], index: 4, kind: input, shape index: {}]
  %s5 = inlined_call_operand.hbm [shape: f32[1,128], index: 5, kind: input, shape index: {}]
  %s6 = inlined_call_operand.hbm [shape: f32[1,128], index: 6, kind: input, shape index: {}]
  %s7 = inlined_call_operand.hbm [shape: bf16[128,256], index: 7, kind: input, shape index: {}]
  %s8 = inlined_call_operand.hbm [shape: f32[1,256], index: 8, kind: input, shape index: {}]
  %s9 = inlined_call_operand.hbm [shape: bf16[256,128], index: 9, kind: input, shape index: {}]
  %s10 = inlined_call_operand.hbm [shape: f32[1,128], index: 10, kind: input, shape index: {}]
  %s11 = inlined_call_operand.hbm [shape: f32[2,16,128], index: 11, kind: output, shape index: {}]
  %s12 = sld [smem:[#allocation0]]
  $region121: #{encoder_block.1} parent=0
    _
  %s14 = ssub.s32 1, %s12
  %s15 = scalar_select 0, %s14, %s12
  $region1: #{encoder_block.1} parent=0
    #allocation3 [shape = 'u8[16384]{0}', space=vmem, size = 0x4000, scoped, tag = 'input window, operand 0']
    #allocation4 [shape = 's32[2]{0}', space=sflag, size = 0x8, scoped, tag = 'scoped memory for encoder_block.1']
    #allocation5 [shape = 's32[2]{0}', space=sflag, size = 0x8, scoped, tag = 'scoped memory for encoder_block.1']
    #allocation6 [shape = 'u8[98304]{0}', space=vmem, size = 0x18000, scoped, tag = 'input window, operand 1, single buffered']
    #allocation7 [shape = 's32[1]{0}', space=sflag, size = 0x4, scoped, tag = 'scoped memory for encoder_block.1']
    #allocation8 [shape = 'u8[1536]{0}', space=vmem, size = 0x800, scoped, tag = 'input window, operand 2, single buffered']
    #allocation9 [shape = 'u8[32768]{0}', space=vmem, size = 0x8000, scoped, tag = 'input window, operand 3, single buffered']
    #allocation10 [shape = 's32[1]{0}', space=sflag, size = 0x4, scoped, tag = 'scoped memory for encoder_block.1']
    #allocation11 [shape = 'u8[512]{0}', space=vmem, size = 0x400, scoped, tag = 'input window, operand 4, single buffered']
    #allocation12 [shape = 'u8[512]{0}', space=vmem, size = 0x400, scoped, tag = 'input window, operand 5, single buffered']
    #allocation13 [shape = 's32[1]{0}', space=sflag, size = 0x4, scoped, tag = 'scoped memory for encoder_block.1']
    #allocation14 [shape = 'u8[512]{0}', space=vmem, size = 0x400, scoped, tag = 'input window, operand 6, single buffered']
    #allocation15 [shape = 'u8[65536]{0}', space=vmem, size = 0x10000, scoped, tag = 'input window, operand 7, single buffered']
    #allocation16 [shape = 's32[1]{0}', space=sflag, size = 0x4, scoped, tag = 'scoped memory for encoder_block.1']
    #allocation17 [shape = 'u8[1024]{0}', space=vmem, size = 0x400, scoped, tag = 'input window, operand 8, single buffered']
    #allocation18 [shape = 'u8[65536]{0}', space=vmem, size = 0x10000, scoped, tag = 'input window, operand 9, single buffered']
    #allocation19 [shape = 's32[1]{0}', space=sflag, size = 0x4, scoped, tag = 'scoped memory for encoder_block.1']
    #allocation20 [shape = 'u8[512]{0}', space=vmem, size = 0x400, scoped, tag = 'input window, operand 10, single buffered']
    #allocation21 [shape = 'u8[16384]{0}', space=vmem, size = 0x4000, scoped, tag = 'output window, operand 0']
    %16 = vsyncpa [#allocation4], 0
    %s17 = scalar_lea.sflag [#allocation4], 1
    %18 = vsyncpa %s17, 0
    %19 = vsyncpa [#allocation7], 0
    %20 = vsyncpa [#allocation10], 0
    %21 = vsyncpa [#allocation13], 0
    %22 = vsyncpa [#allocation16], 0
    %23 = vsyncpa [#allocation19], 0
    %24 = vsyncpa [#allocation5], 0
    %s25 = scalar_lea.sflag [#allocation5], 1
    %26 = vsyncpa %s25, 0
    loop: start=0, step=1, limit=4
    $region2: #{encoder_block.1} parent=1 // loop_pre_header
      _
    $region3: #{encoder_block.1} parent=1 // loop_header
      %s28 = sphi 0, %s32
      %p29 = scmp.ge.s32.totalorder %s28, 4
      %s38 = sphi 0, %s40
      %s41 = sphi 0, %s38
      %s42 = sphi 0, %s41
      %s58 = sphi 0, %s42
      %s62 = sphi 0, %s62
      %s64 = sphi 0, %s62
      %s65 = sphi 0, %s64
      %s79 = sphi 0, %s65
      %s83 = sphi 0, %s83
      %s85 = sphi 0, %s83
      %s86 = sphi 0, %s85
      %s100 = sphi 0, %s86
      %s104 = sphi 0, %s104
      %s106 = sphi 0, %s104
      %s107 = sphi 0, %s106
      %s121 = sphi 0, %s107
      %s125 = sphi 0, %s125
      %s127 = sphi 0, %s125
      %s128 = sphi 0, %s127
      %s142 = sphi 0, %s128
      %s146 = sphi 0, %s146
      %s148 = sphi 0, %s146
      %s149 = sphi 0, %s148
      %s163 = sphi 0, %s149
      %s167 = sphi 0, %s167
      %s169 = sphi 0, %s167
      %s170 = sphi 0, %s169
      %s184 = sphi 0, %s170
      %s188 = sphi 0, %s188
      %s190 = sphi 0, %s188
      %s191 = sphi 0, %s190
      %s205 = sphi 0, %s191
      %s209 = sphi 0, %s209
      %s211 = sphi 0, %s209
      %s212 = sphi 0, %s211
      %s226 = sphi 0, %s212
      %s230 = sphi 0, %s230
      %s232 = sphi 0, %s230
      %s233 = sphi 0, %s232
      %s247 = sphi 0, %s233
      %s251 = sphi 0, %s251
      %s253 = sphi 0, %s251
      %s254 = sphi 0, %s253
      %s268 = sphi 0, %s254
      %s274 = sphi 0, %s276
      %s277 = sphi 0, %s274
      %s278 = sphi 0, %s277
      %s294 = sphi 0, %s278
    $region4: #{encoder_block.1} parent=1 // loop_header_branch
      %31 = sbr.rel (%p29) target = $region8
    $region5: #{encoder_block.1} parent=1 // loop_body
      %s33 = ssub.s32 %s28, 1
      %s34 = ssub.s32 %s28, 2
      %s35 = sadd.s32 %s28, 1
      %s36 = ssub.s32 %s28, %s35
      %p37 = scmp.eq.s32.totalorder %s36, 0
      %s39 = sadd.s32 %s38, 1
      %s40 = scalar_select %p37, %s38, %s39
      %p43 = pneg %p37
      %p44 = scmp.eq.s32.totalorder %s28, 1
      %p45 = por %p43, %p44
      %p46 = scmp.ne.s32.totalorder %s38, %s41
      %p47 = scmp.eq.s32.totalorder %s28, 0
      %p48 = por %p46, %p47
      %p49 = scmp.ne.s32.totalorder %s38, %s41
      %p50 = scmp.eq.s32.totalorder %s33, 1
      %p51 = por %p49, %p50
      %p52 = scmp.ne.s32.totalorder %s41, %s42
      %p53 = scmp.eq.s32.totalorder %s33, 0
      %p54 = por %p52, %p53
      %p55 = scmp.ne.s32.totalorder %s41, %s42
      %p56 = scmp.eq.s32.totalorder %s34, 1
      %p57 = por %p55, %p56
      %p59 = scmp.ne.s32.totalorder %s42, %s58
      %p60 = scmp.eq.s32.totalorder %s34, 0
      %p61 = por %p59, %p60
      %s63 = sadd.s32 %s62, 1
      %p66 = scmp.eq.s32.totalorder %s28, 1
      %p67 = scmp.ne.s32.totalorder %s62, %s64
      %p68 = scmp.eq.s32.totalorder %s28, 0
      %p69 = por %p67, %p68
      %p70 = scmp.ne.s32.totalorder %s62, %s64
      %p71 = scmp.eq.s32.totalorder %s33, 1
      %p72 = por %p70, %p71
      %p73 = scmp.ne.s32.totalorder %s64, %s65
      %p74 = scmp.eq.s32.totalorder %s33, 0
      %p75 = por %p73, %p74
      %p76 = scmp.ne.s32.totalorder %s64, %s65
      %p77 = scmp.eq.s32.totalorder %s34, 1
      %p78 = por %p76, %p77
      %p80 = scmp.ne.s32.totalorder %s65, %s79
      %p81 = scmp.eq.s32.totalorder %s34, 0
      %p82 = por %p80, %p81
      %s84 = sadd.s32 %s83, 1
      %p87 = scmp.eq.s32.totalorder %s28, 1
      %p88 = scmp.ne.s32.totalorder %s83, %s85
      %p89 = scmp.eq.s32.totalorder %s28, 0
      %p90 = por %p88, %p89
      %p91 = scmp.ne.s32.totalorder %s83, %s85
      %p92 = scmp.eq.s32.totalorder %s33, 1
      %p93 = por %p91, %p92
      %p94 = scmp.ne.s32.totalorder %s85, %s86
      %p95 = scmp.eq.s32.totalorder %s33, 0
      %p96 = por %p94, %p95
      %p97 = scmp.ne.s32.totalorder %s85, %s86
      %p98 = scmp.eq.s32.totalorder %s34, 1
      %p99 = por %p97, %p98
      %p101 = scmp.ne.s32.totalorder %s86, %s100
      %p102 = scmp.eq.s32.totalorder %s34, 0
      %p103 = por %p101, %p102
      %s105 = sadd.s32 %s104, 1
      %p108 = scmp.eq.s32.totalorder %s28, 1
      %p109 = scmp.ne.s32.totalorder %s104, %s106
      %p110 = scmp.eq.s32.totalorder %s28, 0
      %p111 = por %p109, %p110
      %p112 = scmp.ne.s32.totalorder %s104, %s106
      %p113 = scmp.eq.s32.totalorder %s33, 1
      %p114 = por %p112, %p113
      %p115 = scmp.ne.s32.totalorder %s106, %s107
      %p116 = scmp.eq.s32.totalorder %s33, 0
      %p117 = por %p115, %p116
      %p118 = scmp.ne.s32.totalorder %s106, %s107
      %p119 = scmp.eq.s32.totalorder %s34, 1
      %p120 = por %p118, %p119
      %p122 = scmp.ne.s32.totalorder %s107, %s121
      %p123 = scmp.eq.s32.totalorder %s34, 0
      %p124 = por %p122, %p123
      %s126 = sadd.s32 %s125, 1
      %p129 = scmp.eq.s32.totalorder %s28, 1
      %p130 = scmp.ne.s32.totalorder %s125, %s127
      %p131 = scmp.eq.s32.totalorder %s28, 0
      %p132 = por %p130, %p131
      %p133 = scmp.ne.s32.totalorder %s125, %s127
      %p134 = scmp.eq.s32.totalorder %s33, 1
      %p135 = por %p133, %p134
      %p136 = scmp.ne.s32.totalorder %s127, %s128
      %p137 = scmp.eq.s32.totalorder %s33, 0
      %p138 = por %p136, %p137
      %p139 = scmp.ne.s32.totalorder %s127, %s128
      %p140 = scmp.eq.s32.totalorder %s34, 1
      %p141 = por %p139, %p140
      %p143 = scmp.ne.s32.totalorder %s128, %s142
      %p144 = scmp.eq.s32.totalorder %s34, 0
      %p145 = por %p143, %p144
      %s147 = sadd.s32 %s146, 1
      %p150 = scmp.eq.s32.totalorder %s28, 1
      %p151 = scmp.ne.s32.totalorder %s146, %s148
      %p152 = scmp.eq.s32.totalorder %s28, 0
      %p153 = por %p151, %p152
      %p154 = scmp.ne.s32.totalorder %s146, %s148
      %p155 = scmp.eq.s32.totalorder %s33, 1
      %p156 = por %p154, %p155
      %p157 = scmp.ne.s32.totalorder %s148, %s149
      %p158 = scmp.eq.s32.totalorder %s33, 0
      %p159 = por %p157, %p158
      %p160 = scmp.ne.s32.totalorder %s148, %s149
      %p161 = scmp.eq.s32.totalorder %s34, 1
      %p162 = por %p160, %p161
      %p164 = scmp.ne.s32.totalorder %s149, %s163
      %p165 = scmp.eq.s32.totalorder %s34, 0
      %p166 = por %p164, %p165
      %s168 = sadd.s32 %s167, 1
      %p171 = scmp.eq.s32.totalorder %s28, 1
      %p172 = scmp.ne.s32.totalorder %s167, %s169
      %p173 = scmp.eq.s32.totalorder %s28, 0
      %p174 = por %p172, %p173
      %p175 = scmp.ne.s32.totalorder %s167, %s169
      %p176 = scmp.eq.s32.totalorder %s33, 1
      %p177 = por %p175, %p176
      %p178 = scmp.ne.s32.totalorder %s169, %s170
      %p179 = scmp.eq.s32.totalorder %s33, 0
      %p180 = por %p178, %p179
      %p181 = scmp.ne.s32.totalorder %s169, %s170
      %p182 = scmp.eq.s32.totalorder %s34, 1
      %p183 = por %p181, %p182
      %p185 = scmp.ne.s32.totalorder %s170, %s184
      %p186 = scmp.eq.s32.totalorder %s34, 0
      %p187 = por %p185, %p186
      %s189 = sadd.s32 %s188, 1
      %p192 = scmp.eq.s32.totalorder %s28, 1
      %p193 = scmp.ne.s32.totalorder %s188, %s190
      %p194 = scmp.eq.s32.totalorder %s28, 0
      %p195 = por %p193, %p194
      %p196 = scmp.ne.s32.totalorder %s188, %s190
      %p197 = scmp.eq.s32.totalorder %s33, 1
      %p198 = por %p196, %p197
      %p199 = scmp.ne.s32.totalorder %s190, %s191
      %p200 = scmp.eq.s32.totalorder %s33, 0
      %p201 = por %p199, %p200
      %p202 = scmp.ne.s32.totalorder %s190, %s191
      %p203 = scmp.eq.s32.totalorder %s34, 1
      %p204 = por %p202, %p203
      %p206 = scmp.ne.s32.totalorder %s191, %s205
      %p207 = scmp.eq.s32.totalorder %s34, 0
      %p208 = por %p206, %p207
      %s210 = sadd.s32 %s209, 1
      %p213 = scmp.eq.s32.totalorder %s28, 1
      %p214 = scmp.ne.s32.totalorder %s209, %s211
      %p215 = scmp.eq.s32.totalorder %s28, 0
      %p216 = por %p214, %p215
      %p217 = scmp.ne.s32.totalorder %s209, %s211
      %p218 = scmp.eq.s32.totalorder %s33, 1
      %p219 = por %p217, %p218
      %p220 = scmp.ne.s32.totalorder %s211, %s212
      %p221 = scmp.eq.s32.totalorder %s33, 0
      %p222 = por %p220, %p221
      %p223 = scmp.ne.s32.totalorder %s211, %s212
      %p224 = scmp.eq.s32.totalorder %s34, 1
      %p225 = por %p223, %p224
      %p227 = scmp.ne.s32.totalorder %s212, %s226
      %p228 = scmp.eq.s32.totalorder %s34, 0
      %p229 = por %p227, %p228
      %s231 = sadd.s32 %s230, 1
      %p234 = scmp.eq.s32.totalorder %s28, 1
      %p235 = scmp.ne.s32.totalorder %s230, %s232
      %p236 = scmp.eq.s32.totalorder %s28, 0
      %p237 = por %p235, %p236
      %p238 = scmp.ne.s32.totalorder %s230, %s232
      %p239 = scmp.eq.s32.totalorder %s33, 1
      %p240 = por %p238, %p239
      %p241 = scmp.ne.s32.totalorder %s232, %s233
      %p242 = scmp.eq.s32.totalorder %s33, 0
      %p243 = por %p241, %p242
      %p244 = scmp.ne.s32.totalorder %s232, %s233
      %p245 = scmp.eq.s32.totalorder %s34, 1
      %p246 = por %p244, %p245
      %p248 = scmp.ne.s32.totalorder %s233, %s247
      %p249 = scmp.eq.s32.totalorder %s34, 0
      %p250 = por %p248, %p249
      %s252 = sadd.s32 %s251, 1
      %p255 = scmp.eq.s32.totalorder %s28, 1
      %p256 = scmp.ne.s32.totalorder %s251, %s253
      %p257 = scmp.eq.s32.totalorder %s28, 0
      %p258 = por %p256, %p257
      %p259 = scmp.ne.s32.totalorder %s251, %s253
      %p260 = scmp.eq.s32.totalorder %s33, 1
      %p261 = por %p259, %p260
      %p262 = scmp.ne.s32.totalorder %s253, %s254
      %p263 = scmp.eq.s32.totalorder %s33, 0
      %p264 = por %p262, %p263
      %p265 = scmp.ne.s32.totalorder %s253, %s254
      %p266 = scmp.eq.s32.totalorder %s34, 1
      %p267 = por %p265, %p266
      %p269 = scmp.ne.s32.totalorder %s254, %s268
      %p270 = scmp.eq.s32.totalorder %s34, 0
      %p271 = por %p269, %p270
      %s272 = ssub.s32 %s28, %s35
      %p273 = scmp.eq.s32.totalorder %s272, 0
      %s275 = sadd.s32 %s274, 1
      %s276 = scalar_select %p273, %s274, %s275
      %p279 = pneg %p273
      %p280 = scmp.eq.s32.totalorder %s28, 1
      %p281 = por %p279, %p280
      %p282 = scmp.ne.s32.totalorder %s274, %s277
      %p283 = scmp.eq.s32.totalorder %s28, 0
      %p284 = por %p282, %p283
      %p285 = scmp.ne.s32.totalorder %s274, %s277
      %p286 = scmp.eq.s32.totalorder %s33, 1
      %p287 = por %p285, %p286
      %p288 = scmp.ne.s32.totalorder %s277, %s278
      %p289 = scmp.eq.s32.totalorder %s33, 0
      %p290 = por %p288, %p289
      %p291 = scmp.ne.s32.totalorder %s277, %s278
      %p292 = scmp.eq.s32.totalorder %s34, 1
      %p293 = por %p291, %p292
      %p295 = scmp.ne.s32.totalorder %s278, %s294
      %p296 = scmp.eq.s32.totalorder %s34, 0
      %p297 = por %p295, %p296
      %p298 = scmp.le.s32.totalorder 1, %s28
      %p299 = scmp.lt.s32.totalorder %s28, 3
      %p300 = pnand %p298, %p299
      %p301 = pneg %p300
      // Predicated region
      $region9: #{encoder_block.1} parent=5 // pred_check
        _
      $region10: #{encoder_block.1} parent=5 // pred_check_branch
        %303 = sbr.rel (%p300) target = $region12
      $region11: #{encoder_block.1} parent=5 // pred_region
        %s304 = ssub.s32 %s28, 1
        // Predicated region
        $region13: #{encoder_block.1} parent=11 // pred_check
          %p305 = pneg %p75
        $region14: #{encoder_block.1} parent=11 // pred_check_branch
          %307 = sbr.rel (%p305) target = $region16
        $region15: #{encoder_block.1} parent=11 // pred_region
          %s309 = ssub.s32 3072, 3072
          %310 = vsyncadd [#allocation7], %s309
          %s311 = sshll.u32 [#allocation6], 4
          %s312 = int_to_ptr.vmem [resolvable:$true] %s311
          %317 = dma.hbm_to_vmem [thread:$0]  %s1, 3072, %s312, [#allocation7], 192, 192, 12
        $region16: #{encoder_block.1} parent=11 // pred_fallthru
          _
        // Predicated region
        $region17: #{encoder_block.1} parent=11 // pred_check
          %p318 = pneg %p96
        $region18: #{encoder_block.1} parent=11 // pred_check_branch
          %320 = sbr.rel (%p318) target = $region20
        $region19: #{encoder_block.1} parent=11 // pred_region
          %s322 = ssub.s32 48, 48
          %323 = vsyncadd [#allocation7], %s322
          %s325 = sshll.u32 [#allocation8], 4
          %s326 = int_to_ptr.vmem [resolvable:$true] %s325
          %328 = dma.hbm_to_vmem [thread:$0]  %s2, 48, %s326, [#allocation7]
        $region20: #{encoder_block.1} parent=11 // pred_fallthru
          _
        // Predicated region
        $region21: #{encoder_block.1} parent=11 // pred_check
          %p329 = pneg %p117
        $region22: #{encoder_block.1} parent=11 // pred_check_branch
          %331 = sbr.rel (%p329) target = $region24
        $region23: #{encoder_block.1} parent=11 // pred_region
          %s333 = ssub.s32 1024, 1024
          %334 = vsyncadd [#allocation10], %s333
          %s335 = sshll.u32 [#allocation9], 4
          %s336 = int_to_ptr.vmem [resolvable:$true] %s335
          %341 = dma.hbm_to_vmem [thread:$0]  %s3, 1024, %s336, [#allocation10], 64, 64, 4
        $region24: #{encoder_block.1} parent=11 // pred_fallthru
          _
        // Predicated region
        $region25: #{encoder_block.1} parent=11 // pred_check
          %p342 = pneg %p138
        $region26: #{encoder_block.1} parent=11 // pred_check_branch
          %344 = sbr.rel (%p342) target = $region28
        $region27: #{encoder_block.1} parent=11 // pred_region
          %s346 = ssub.s32 16, 16
          %347 = vsyncadd [#allocation10], %s346
          %s349 = sshll.u32 [#allocation11], 4
          %s350 = int_to_ptr.vmem [resolvable:$true] %s349
          %352 = dma.hbm_to_vmem [thread:$0]  %s4, 16, %s350, [#allocation10]
        $region28: #{encoder_block.1} parent=11 // pred_fallthru
          _
        // Predicated region
        $region29: #{encoder_block.1} parent=11 // pred_check
          %p353 = pneg %p159
        $region30: #{encoder_block.1} parent=11 // pred_check_branch
          %355 = sbr.rel (%p353) target = $region32
        $region31: #{encoder_block.1} parent=11 // pred_region
          %s357 = ssub.s32 16, 16
          %358 = vsyncadd [#allocation13], %s357
          %s360 = sshll.u32 [#allocation12], 4
          %s361 = int_to_ptr.vmem [resolvable:$true] %s360
          %363 = dma.hbm_to_vmem [thread:$0]  %s5, 16, %s361, [#allocation13]
        $region32: #{encoder_block.1} parent=11 // pred_fallthru
          _
        // Predicated region
        $region33: #{encoder_block.1} parent=11 // pred_check
          %p364 = pneg %p180
        $region34: #{encoder_block.1} parent=11 // pred_check_branch
          %366 = sbr.rel (%p364) target = $region36
        $region35: #{encoder_block.1} parent=11 // pred_region
          %s368 = ssub.s32 16, 16
          %369 = vsyncadd [#allocation13], %s368
          %s371 = sshll.u32 [#allocation14], 4
          %s372 = int_to_ptr.vmem [resolvable:$true] %s371
          %374 = dma.hbm_to_vmem [thread:$0]  %s6, 16, %s372, [#allocation13]
        $region36: #{encoder_block.1} parent=11 // pred_fallthru
          _
        // Predicated region
        $region37: #{encoder_block.1} parent=11 // pred_check
          %p375 = pneg %p201
        $region38: #{encoder_block.1} parent=11 // pred_check_branch
          %377 = sbr.rel (%p375) target = $region40
        $region39: #{encoder_block.1} parent=11 // pred_region
          %s379 = ssub.s32 2048, 2048
          %380 = vsyncadd [#allocation16], %s379
          %s381 = sshll.u32 [#allocation15], 4
          %s382 = int_to_ptr.vmem [resolvable:$true] %s381
          %387 = dma.hbm_to_vmem [thread:$0]  %s7, 2048, %s382, [#allocation16], 128, 128, 8
        $region40: #{encoder_block.1} parent=11 // pred_fallthru
          _
        // Predicated region
        $region41: #{encoder_block.1} parent=11 // pred_check
          %p388 = pneg %p222
        $region42: #{encoder_block.1} parent=11 // pred_check_branch
          %390 = sbr.rel (%p388) target = $region44
        $region43: #{encoder_block.1} parent=11 // pred_region
          %s392 = ssub.s32 32, 32
          %393 = vsyncadd [#allocation16], %s392
          %s395 = sshll.u32 [#allocation17], 4
          %s396 = int_to_ptr.vmem [resolvable:$true] %s395
          %398 = dma.hbm_to_vmem [thread:$0]  %s8, 32, %s396, [#allocation16]
        $region44: #{encoder_block.1} parent=11 // pred_fallthru
          _
        // Predicated region
        $region45: #{encoder_block.1} parent=11 // pred_check
          %p399 = pneg %p243
        $region46: #{encoder_block.1} parent=11 // pred_check_branch
          %401 = sbr.rel (%p399) target = $region48
        $region47: #{encoder_block.1} parent=11 // pred_region
          %s403 = ssub.s32 2048, 2048
          %404 = vsyncadd [#allocation19], %s403
          %s405 = sshll.u32 [#allocation18], 4
          %s406 = int_to_ptr.vmem [resolvable:$true] %s405
          %411 = dma.hbm_to_vmem [thread:$0]  %s9, 2048, %s406, [#allocation19], 64, 64, 4
        $region48: #{encoder_block.1} parent=11 // pred_fallthru
          _
        // Predicated region
        $region49: #{encoder_block.1} parent=11 // pred_check
          %p412 = pneg %p264
        $region50: #{encoder_block.1} parent=11 // pred_check_branch
          %414 = sbr.rel (%p412) target = $region52
        $region51: #{encoder_block.1} parent=11 // pred_region
          %s416 = ssub.s32 16, 16
          %417 = vsyncadd [#allocation19], %s416
          %s419 = sshll.u32 [#allocation20], 4
          %s420 = int_to_ptr.vmem [resolvable:$true] %s419
          %422 = dma.hbm_to_vmem [thread:$0]  %s10, 16, %s420, [#allocation19]
        $region52: #{encoder_block.1} parent=11 // pred_fallthru
          _
      $region12: #{encoder_block.1} parent=5 // pred_fallthru
        _
      %p423 = scmp.lt.s32.totalorder %s28, 2
      // Predicated region
      $region53: #{encoder_block.1} parent=5 // pred_check
        %p424 = pneg %p423
      $region54: #{encoder_block.1} parent=5 // pred_check_branch
        %426 = sbr.rel (%p424) target = $region56
      $region55: #{encoder_block.1} parent=5 // pred_region
        // Predicated region
        $region57: #{encoder_block.1} parent=55 // pred_check
          %p427 = pneg %p48
        $region58: #{encoder_block.1} parent=55 // pred_check_branch
          %429 = sbr.rel (%p427) target = $region60
        $region59: #{encoder_block.1} parent=55 // pred_region
          %s430 = sand.u32 %s38, 1
          %s431 = scalar_lea.sflag [#allocation4], %s430
          %s432 = sand.u32 %s38, 1
          %s433 = smul.addr %s432, 16
          %s434 = scalar_lea.vmem [#allocation3], %s433
          %s436 = ssub.s32 256, 256
          %437 = vsyncadd %s431, %s436
          %s438 = smul.addr %s28, 2
          %s439 = smul.addr %s438, 128
          %s440 = scalar_lea.hbm %s0, %s439
          %s441 = sshll.u32 %s434, 4
          %s442 = int_to_ptr.vmem [resolvable:$true] %s441
          %447 = dma.hbm_to_vmem [thread:$0]  %s440, 256, %s442, %s431, 128, 128, 8
        $region60: #{encoder_block.1} parent=55 // pred_fallthru
          _
      $region56: #{encoder_block.1} parent=5 // pred_fallthru
        _
      %p448 = scmp.le.s32.totalorder 1, %s28
      %p449 = scmp.lt.s32.totalorder %s28, 3
      %p450 = pnand %p448, %p449
      %p451 = pneg %p450
      // Predicated region
      $region61: #{encoder_block.1} parent=5 // pred_check
        _
      $region62: #{encoder_block.1} parent=5 // pred_check_branch
        %453 = sbr.rel (%p450) target = $region64
      $region63: #{encoder_block.1} parent=5 // pred_region
        %s454 = ssub.s32 %s28, 1
        %s455 = sand.u32 %s41, 1
        %s456 = scalar_lea.sflag [#allocation4], %s455
        %s457 = sand.u32 %s41, 1
        %s458 = smul.addr %s457, 16
        %s459 = scalar_lea.vmem [#allocation3], %s458
        // Predicated region
        $region65: #{encoder_block.1} parent=63 // pred_check
          %p460 = pneg %p54
        $region66: #{encoder_block.1} parent=63 // pred_check_branch
          %462 = sbr.rel (%p460) target = $region68
        $region67: #{encoder_block.1} parent=63 // pred_region
          %463 = dma.done %s456, 256
        $region68: #{encoder_block.1} parent=63 // pred_fallthru
          _
        // Predicated region
        $region69: #{encoder_block.1} parent=63 // pred_check
          %p464 = pneg %p75
        $region70: #{encoder_block.1} parent=63 // pred_check_branch
          %466 = sbr.rel (%p464) target = $region72
        $region71: #{encoder_block.1} parent=63 // pred_region
          %467 = dma.done [#allocation7], 3072
        $region72: #{encoder_block.1} parent=63 // pred_fallthru
          _
        // Predicated region
        $region73: #{encoder_block.1} parent=63 // pred_check
          %p468 = pneg %p96
        $region74: #{encoder_block.1} parent=63 // pred_check_branch
          %470 = sbr.rel (%p468) target = $region76
        $region75: #{encoder_block.1} parent=63 // pred_region
          %471 = dma.done [#allocation7], 48
        $region76: #{encoder_block.1} parent=63 // pred_fallthru
          _
        // Predicated region
        $region77: #{encoder_block.1} parent=63 // pred_check
          %p472 = pneg %p117
        $region78: #{encoder_block.1} parent=63 // pred_check_branch
          %474 = sbr.rel (%p472) target = $region80
        $region79: #{encoder_block.1} parent=63 // pred_region
          %475 = dma.done [#allocation10], 1024
        $region80: #{encoder_block.1} parent=63 // pred_fallthru
          _
        // Predicated region
        $region81: #{encoder_block.1} parent=63 // pred_check
          %p476 = pneg %p138
        $region82: #{encoder_block.1} parent=63 // pred_check_branch
          %478 = sbr.rel (%p476) target = $region84
        $region83: #{encoder_block.1} parent=63 // pred_region
          %479 = dma.done [#allocation10], 16
        $region84: #{encoder_block.1} parent=63 // pred_fallthru
          _
        // Predicated region
        $region85: #{encoder_block.1} parent=63 // pred_check
          %p480 = pneg %p159
        $region86: #{encoder_block.1} parent=63 // pred_check_branch
          %482 = sbr.rel (%p480) target = $region88
        $region87: #{encoder_block.1} parent=63 // pred_region
          %483 = dma.done [#allocation13], 16
        $region88: #{encoder_block.1} parent=63 // pred_fallthru
          _
        // Predicated region
        $region89: #{encoder_block.1} parent=63 // pred_check
          %p484 = pneg %p180
        $region90: #{encoder_block.1} parent=63 // pred_check_branch
          %486 = sbr.rel (%p484) target = $region92
        $region91: #{encoder_block.1} parent=63 // pred_region
          %487 = dma.done [#allocation13], 16
        $region92: #{encoder_block.1} parent=63 // pred_fallthru
          _
        // Predicated region
        $region93: #{encoder_block.1} parent=63 // pred_check
          %p488 = pneg %p201
        $region94: #{encoder_block.1} parent=63 // pred_check_branch
          %490 = sbr.rel (%p488) target = $region96
        $region95: #{encoder_block.1} parent=63 // pred_region
          %491 = dma.done [#allocation16], 2048
        $region96: #{encoder_block.1} parent=63 // pred_fallthru
          _
        // Predicated region
        $region97: #{encoder_block.1} parent=63 // pred_check
          %p492 = pneg %p222
        $region98: #{encoder_block.1} parent=63 // pred_check_branch
          %494 = sbr.rel (%p492) target = $region100
        $region99: #{encoder_block.1} parent=63 // pred_region
          %495 = dma.done [#allocation16], 32
        $region100: #{encoder_block.1} parent=63 // pred_fallthru
          _
        // Predicated region
        $region101: #{encoder_block.1} parent=63 // pred_check
          %p496 = pneg %p243
        $region102: #{encoder_block.1} parent=63 // pred_check_branch
          %498 = sbr.rel (%p496) target = $region104
        $region103: #{encoder_block.1} parent=63 // pred_region
          %499 = dma.done [#allocation19], 2048
        $region104: #{encoder_block.1} parent=63 // pred_fallthru
          _
        // Predicated region
        $region105: #{encoder_block.1} parent=63 // pred_check
          %p500 = pneg %p264
        $region106: #{encoder_block.1} parent=63 // pred_check_branch
          %502 = sbr.rel (%p500) target = $region108
        $region107: #{encoder_block.1} parent=63 // pred_region
          %503 = dma.done [#allocation19], 16
        $region108: #{encoder_block.1} parent=63 // pred_fallthru
          _
        %s504 = sand.u32 %s41, 1
        %s505 = scalar_lea.sflag [#allocation4], %s504
        %s506 = sand.u32 %s41, 1
        %s507 = smul.addr %s506, 16
        %s508 = scalar_lea.vmem [#allocation3], %s507
        %p509 = pneg %p54
        %p510 = pneg %p51
        %p511 = pneg %p75
        %p512 = pneg %p72
        %p513 = pneg %p96
        %p514 = pneg %p93
        %p515 = pneg %p117
        %p516 = pneg %p114
        %p517 = pneg %p138
        %p518 = pneg %p135
        %p519 = pneg %p159
        %p520 = pneg %p156
        %p521 = pneg %p180
        %p522 = pneg %p177
        %p523 = pneg %p201
        %p524 = pneg %p198
        %p525 = pneg %p222
        %p526 = pneg %p219
        %p527 = pneg %p243
        %p528 = pneg %p240
        %p529 = pneg %p264
        %p530 = pneg %p261
        %p531 = pneg %p290
        %p532 = pneg %p287
        %s533 = sand.u32 %s277, 1
        %s534 = scalar_lea.sflag [#allocation5], %s533
        %s535 = sand.u32 %s277, 1
        %s536 = smul.addr %s535, 16
        %s537 = scalar_lea.vmem [#allocation21], %s536
        %v539 = vld [vmem:[%s459] sm:$0xff]
        %v540 = vld [vmem:[%s459 + $0x8] sm:$0xff]
        %v541 = vpack.c.bf16 %v540, %v539
        %v542 = vld [vmem:[#allocation6] sm:$0xff]
        %v543 = vld [vmem:[#allocation6 + $0x8] sm:$0xf]
        %v544 = vld [vmem:[#allocation6 + $0xc] sm:$0xff]
        %v545 = vld [vmem:[#allocation6 + $0x14] sm:$0xf]
        %v546 = vld [vmem:[#allocation6 + $0x18] sm:$0xff]
        %v547 = vld [vmem:[#allocation6 + $0x20] sm:$0xf]
        %v548 = vld [vmem:[#allocation6 + $0x24] sm:$0xff]
        %v549 = vld [vmem:[#allocation6 + $0x2c] sm:$0xf]
        %v550 = vld [vmem:[#allocation6 + $0x30] sm:$0xff]
        %v551 = vld [vmem:[#allocation6 + $0x38] sm:$0xf]
        %v552 = vld [vmem:[#allocation6 + $0x3c] sm:$0xff]
        %v553 = vld [vmem:[#allocation6 + $0x44] sm:$0xf]
        %v554 = vld [vmem:[#allocation6 + $0x48] sm:$0xff]
        %v555 = vld [vmem:[#allocation6 + $0x50] sm:$0xf]
        %v556 = vld [vmem:[#allocation6 + $0x54] sm:$0xff]
        %v557 = vld [vmem:[#allocation6 + $0x5c] sm:$0xf]
        %v558 = vld [vmem:[#allocation6 + $0x60] sm:$0xff]
        %v559 = vld [vmem:[#allocation6 + $0x68] sm:$0xf]
        %v560 = vld [vmem:[#allocation6 + $0x6c] sm:$0xff]
        %v561 = vld [vmem:[#allocation6 + $0x74] sm:$0xf]
        %v562 = vld [vmem:[#allocation6 + $0x78] sm:$0xff]
        %v563 = vld [vmem:[#allocation6 + $0x80] sm:$0xf]
        %v564 = vld [vmem:[#allocation6 + $0x84] sm:$0xff]
        %v565 = vld [vmem:[#allocation6 + $0x8c] sm:$0xf]
        %v566 = vld [vmem:[#allocation6 + $0x90] sm:$0xff]
        %v567 = vld [vmem:[#allocation6 + $0x98] sm:$0xf]
        %v568 = vld [vmem:[#allocation6 + $0x9c] sm:$0xff]
        %v569 = vld [vmem:[#allocation6 + $0xa4] sm:$0xf]
        %v570 = vld [vmem:[#allocation6 + $0xa8] sm:$0xff]
        %v571 = vld [vmem:[#allocation6 + $0xb0] sm:$0xf]
        %v572 = vld [vmem:[#allocation6 + $0xb4] sm:$0xff]
        %v573 = vld [vmem:[#allocation6 + $0xbc] sm:$0xf]
        %v574 = vld [vmem:[#allocation8] sm:$0x7]
        %v576 = vlaneseq
        %v577 = vshrl.u32 %v576, 7
        %v578 = vsub.s32 0, %v577
        %v579 = vrot.slane %v574, %v578
        %v580 = vlaneseq
        %v581 = vshrl.u32 %v580, 7
        %v582 = vsub.s32 1, %v581
        %v583 = vrot.slane %v574, %v582
        %v584 = vlaneseq
        %v585 = vshrl.u32 %v584, 7
        %v586 = vsub.s32 2, %v585
        %v587 = vrot.slane %v574, %v586
        %v623 = vunpack.c.l.b16 %v542
        %v624 = vunpack.c.h.b16 %v542
        %v625 = vunpack.c.l.b16 %v543
        %v626 = vunpack.c.l.b16 %v544
        %v627 = vunpack.c.h.b16 %v544
        %v628 = vunpack.c.l.b16 %v545
        %v629 = vunpack.c.l.b16 %v546
        %v630 = vunpack.c.h.b16 %v546
        %v631 = vunpack.c.l.b16 %v547
        %v632 = vunpack.c.l.b16 %v548
        %v633 = vunpack.c.h.b16 %v548
        %v634 = vunpack.c.l.b16 %v549
        %v635 = vunpack.c.l.b16 %v550
        %v636 = vunpack.c.h.b16 %v550
        %v637 = vunpack.c.l.b16 %v551
        %v638 = vunpack.c.l.b16 %v552
        %v639 = vunpack.c.h.b16 %v552
        %v640 = vunpack.c.l.b16 %v553
        %v641 = vunpack.c.l.b16 %v554
        %v642 = vunpack.c.h.b16 %v554
        %v643 = vunpack.c.l.b16 %v555
        %v644 = vunpack.c.l.b16 %v556
        %v645 = vunpack.c.h.b16 %v556
        %v646 = vunpack.c.l.b16 %v557
        %v647 = vunpack.c.l.b16 %v558
        %v648 = vunpack.c.h.b16 %v558
        %v649 = vunpack.c.l.b16 %v559
        %v650 = vunpack.c.l.b16 %v560
        %v651 = vunpack.c.h.b16 %v560
        %v652 = vunpack.c.l.b16 %v561
        %v653 = vunpack.c.l.b16 %v562
        %v654 = vunpack.c.h.b16 %v562
        %v655 = vunpack.c.l.b16 %v563
        %v656 = vunpack.c.l.b16 %v564
        %v657 = vunpack.c.h.b16 %v564
        %v658 = vunpack.c.l.b16 %v565
        %v659 = vunpack.c.l.b16 %v566
        %v660 = vunpack.c.h.b16 %v566
        %v661 = vunpack.c.l.b16 %v567
        %v662 = vunpack.c.l.b16 %v568
        %v663 = vunpack.c.h.b16 %v568
        %v664 = vunpack.c.l.b16 %v569
        %v665 = vunpack.c.l.b16 %v570
        %v666 = vunpack.c.h.b16 %v570
        %v667 = vunpack.c.l.b16 %v571
        %v668 = vunpack.c.l.b16 %v572
        %v669 = vunpack.c.h.b16 %v572
        %v670 = vunpack.c.l.b16 %v573
        %v671 = vpack.c.b16 %v626, %v623
        %v672 = vpack.c.b16 %v627, %v624
        %v673 = vpack.c.b16 %v628, %v625
        %v674 = vpack.c.b16 %v632, %v629
        %v675 = vpack.c.b16 %v633, %v630
        %v676 = vpack.c.b16 %v634, %v631
        %v677 = vpack.c.b16 %v638, %v635
        %v678 = vpack.c.b16 %v639, %v636
        %v679 = vpack.c.b16 %v640, %v637
        %v680 = vpack.c.b16 %v644, %v641
        %v681 = vpack.c.b16 %v645, %v642
        %v682 = vpack.c.b16 %v646, %v643
        %v683 = vpack.c.b16 %v650, %v647
        %v684 = vpack.c.b16 %v651, %v648
        %v685 = vpack.c.b16 %v652, %v649
        %v686 = vpack.c.b16 %v656, %v653
        %v687 = vpack.c.b16 %v657, %v654
        %v688 = vpack.c.b16 %v658, %v655
        %v689 = vpack.c.b16 %v662, %v659
        %v690 = vpack.c.b16 %v663, %v660
        %v691 = vpack.c.b16 %v664, %v661
        %v692 = vpack.c.b16 %v668, %v665
        %v693 = vpack.c.b16 %v669, %v666
        %v694 = vpack.c.b16 %v670, %v667
        %719 = vmatprep.subr.bf16.mxu0 %v672
        %720 = vmatpush1.bf16.msra.mxu0 %v671
        %721 = vmatprep.subr.bf16.mxu0 %v675
        %722 = vmatpush1.bf16.msra.mxu0 %v674
        %723 = vmatprep.subr.bf16.mxu0 %v678
        %724 = vmatpush1.bf16.msra.mxu0 %v677
        %725 = vmatprep.subr.bf16.mxu0 %v681
        %726 = vmatpush1.bf16.msra.mxu0 %v680
        %727 = vmatprep.subr.bf16.mxu0 %v684
        %728 = vmatpush1.bf16.msra.mxu0 %v683
        %729 = vmatprep.subr.bf16.mxu0 %v687
        %730 = vmatpush1.bf16.msra.mxu0 %v686
        %731 = vmatprep.subr.bf16.mxu0 %v690
        %732 = vmatpush1.bf16.msra.mxu0 %v689
        %733 = vmatprep.subr.bf16.mxu0 %v693
        %734 = vmatpush1.bf16.msra.mxu0 %v692
        %735 = vmatprep.subr.bf16.mxu0 0
        %736 = vmatpush1.bf16.msra.mxu0 0
        %737 = vmatprep.subr.bf16.mxu0 0
        %738 = vmatpush1.bf16.msra.mxu0 0
        %739 = vmatprep.subr.bf16.mxu0 0
        %740 = vmatpush1.bf16.msra.mxu0 0
        %741 = vmatprep.subr.bf16.mxu0 0
        %742 = vmatpush1.bf16.msra.mxu0 0
        %743 = vmatprep.subr.bf16.mxu0 0
        %744 = vmatpush1.bf16.msra.mxu0 0
        %745 = vmatprep.subr.bf16.mxu0 0
        %746 = vmatpush1.bf16.msra.mxu0 0
        %747 = vmatprep.subr.bf16.mxu0 0
        %748 = vmatpush1.bf16.msra.mxu0 0
        %749 = vmatprep.subr.bf16.mxu0 0
        %750 = vmatpush1.bf16.msra.mxu0 0
        %751 = vmatprep.mubr.bf16.mxu0 0
        %752 = vmatmul.mubr.bf16.gmra.mrb[0].mxu0 %v541
        %v753 = vpop.f32.mrb[0].mxu0
        %v754 = vadd.f32 %v579, %v753
        %v755 = vpop.f32.mrb[0].mxu0
        %v756 = vadd.f32 %v583, %v755
        %v757 = vpop.f32.mrb[0].mxu0
        %v758 = vadd.f32 %v579, %v757
        %v759 = vpop.f32.mrb[0].mxu0
        %v760 = vadd.f32 %v583, %v759
        %761 = vdwg.mxu0
        %762 = vmatprep.subr.bf16.mxu0 0
        %763 = vmatpush1.bf16.msra.mxu0 %v673
        %764 = vmatprep.subr.bf16.mxu0 0
        %765 = vmatpush1.bf16.msra.mxu0 %v676
        %766 = vmatprep.subr.bf16.mxu0 0
        %767 = vmatpush1.bf16.msra.mxu0 %v679
        %768 = vmatprep.subr.bf16.mxu0 0
        %769 = vmatpush1.bf16.msra.mxu0 %v682
        %770 = vmatprep.subr.bf16.mxu0 0
        %771 = vmatpush1.bf16.msra.mxu0 %v685
        %772 = vmatprep.subr.bf16.mxu0 0
        %773 = vmatpush1.bf16.msra.mxu0 %v688
        %774 = vmatprep.subr.bf16.mxu0 0
        %775 = vmatpush1.bf16.msra.mxu0 %v691
        %776 = vmatprep.subr.bf16.mxu0 0
        %777 = vmatpush1.bf16.msra.mxu0 %v694
        %778 = vmatprep.subr.bf16.mxu0 0
        %779 = vmatpush1.bf16.msra.mxu0 0
        %780 = vmatprep.subr.bf16.mxu0 0
        %781 = vmatpush1.bf16.msra.mxu0 0
        %782 = vmatprep.subr.bf16.mxu0 0
        %783 = vmatpush1.bf16.msra.mxu0 0
        %784 = vmatprep.subr.bf16.mxu0 0
        %785 = vmatpush1.bf16.msra.mxu0 0
        %786 = vmatprep.subr.bf16.mxu0 0
        %787 = vmatpush1.bf16.msra.mxu0 0
        %788 = vmatprep.subr.bf16.mxu0 0
        %789 = vmatpush1.bf16.msra.mxu0 0
        %790 = vmatprep.subr.bf16.mxu0 0
        %791 = vmatpush1.bf16.msra.mxu0 0
        %792 = vmatprep.subr.bf16.mxu0 0
        %793 = vmatpush1.bf16.msra.mxu0 0
        %794 = vmatprep.mubr.bf16.mxu0 0
        %795 = vmatmul.mubr.bf16.gmra.mrb[0].mxu0 %v541
        %v796 = vpop.f32.mrb[0].mxu0
        %v797 = vadd.f32 %v587, %v796
        %v798 = vpop.f32.mrb[0].mxu0
        %v799 = vpop.f32.mrb[0].mxu0
        %v800 = vadd.f32 %v587, %v799
        %v801 = vpop.f32.mrb[0].mxu0
        %802 = vdwg.mxu0
        %v803 = vpack.c.bf16 %v758, %v754
        %v804 = vpack.c.bf16 %v760, %v756
        %v805 = vpack.c.bf16 %v800, %v797
        %vm806 = vcmask 130048
        %v808 = vsel %vm806, %v803, 0
        %v811 = vsel %vm806, %v804, 0
        %813 = vmatprep.subr.bf16.mxu0 0
        %814 = vmatpush1.bf16.xpose.msra.mxu0 %v811
        %815 = vmatprep.subr.bf16.mxu0 0
        %816 = vmatpush1.bf16.xpose.msra.mxu0 0
        %817 = vmatprep.subr.bf16.mxu0 0
        %818 = vmatpush1.bf16.xpose.msra.mxu0 0
        %819 = vmatprep.subr.bf16.mxu0 0
        %820 = vmatpush1.bf16.xpose.msra.mxu0 0
        %821 = vmatprep.subr.bf16.mxu0 0
        %822 = vmatpush1.bf16.xpose.msra.mxu0 0
        %823 = vmatprep.subr.bf16.mxu0 0
        %824 = vmatpush1.bf16.xpose.msra.mxu0 0
        %825 = vmatprep.subr.bf16.mxu0 0
        %826 = vmatpush1.bf16.xpose.msra.mxu0 0
        %827 = vmatprep.subr.bf16.mxu0 0
        %828 = vmatpush1.bf16.xpose.msra.mxu0 0
        %829 = vmatprep.subr.bf16.mxu0 0
        %830 = vmatpush1.bf16.xpose.msra.mxu0 0
        %831 = vmatprep.subr.bf16.mxu0 0
        %832 = vmatpush1.bf16.xpose.msra.mxu0 0
        %833 = vmatprep.subr.bf16.mxu0 0
        %834 = vmatpush1.bf16.xpose.msra.mxu0 0
        %835 = vmatprep.subr.bf16.mxu0 0
        %836 = vmatpush1.bf16.xpose.msra.mxu0 0
        %837 = vmatprep.subr.bf16.mxu0 0
        %838 = vmatpush1.bf16.xpose.msra.mxu0 0
        %839 = vmatprep.subr.bf16.mxu0 0
        %840 = vmatpush1.bf16.xpose.msra.mxu0 0
        %841 = vmatprep.subr.bf16.mxu0 0
        %842 = vmatpush1.bf16.xpose.msra.mxu0 0
        %843 = vmatprep.subr.bf16.mxu0 0
        %844 = vmatpush1.bf16.xpose.msra.mxu0 0
        %845 = vmatprep.mubr.bf16.mxu0 0
        %846 = vmatmul.mubr.bf16.gmra.mrb[0].mxu0 %v808
        %v847 = vpop.f32.mrb[0].mxu0
        %v848 = vadd.f32 0.0, %v847
        %v849 = vpop.f32.mrb[0].mxu0
        %v850 = vpop.f32.mrb[0].mxu0
        %v851 = vadd.f32 0.0, %v850
        %v852 = vpop.f32.mrb[0].mxu0
        %853 = vdwg.mxu0
        %855 = vrot.lane.b32.xlu0 %v803, 112
        %v856 = vpop.permute.xlu0 %855
        %858 = vrot.lane.b32.xlu0 %v804, 112
        %v859 = vpop.permute.xlu0 %858
        %v861 = vsel %vm806, %v856, 0
        %v864 = vsel %vm806, %v859, 0
        %866 = vmatprep.subr.bf16.mxu0 0
        %867 = vmatpush1.bf16.xpose.msra.mxu0 %v864
        %868 = vmatprep.subr.bf16.mxu0 0
        %869 = vmatpush1.bf16.xpose.msra.mxu0 0
        %870 = vmatprep.subr.bf16.mxu0 0
        %871 = vmatpush1.bf16.xpose.msra.mxu0 0
        %872 = vmatprep.subr.bf16.mxu0 0
        %873 = vmatpush1.bf16.xpose.msra.mxu0 0
        %874 = vmatprep.subr.bf16.mxu0 0
        %875 = vmatpush1.bf16.xpose.msra.mxu0 0
        %876 = vmatprep.subr.bf16.mxu0 0
        %877 = vmatpush1.bf16.xpose.msra.mxu0 0
        %878 = vmatprep.subr.bf16.mxu0 0
        %879 = vmatpush1.bf16.xpose.msra.mxu0 0
        %880 = vmatprep.subr.bf16.mxu0 0
        %881 = vmatpush1.bf16.xpose.msra.mxu0 0
        %882 = vmatprep.subr.bf16.mxu0 0
        %883 = vmatpush1.bf16.xpose.msra.mxu0 0
        %884 = vmatprep.subr.bf16.mxu0 0
        %885 = vmatpush1.bf16.xpose.msra.mxu0 0
        %886 = vmatprep.subr.bf16.mxu0 0
        %887 = vmatpush1.bf16.xpose.msra.mxu0 0
        %888 = vmatprep.subr.bf16.mxu0 0
        %889 = vmatpush1.bf16.xpose.msra.mxu0 0
        %890 = vmatprep.subr.bf16.mxu0 0
        %891 = vmatpush1.bf16.xpose.msra.mxu0 0
        %892 = vmatprep.subr.bf16.mxu0 0
        %893 = vmatpush1.bf16.xpose.msra.mxu0 0
        %894 = vmatprep.subr.bf16.mxu0 0
        %895 = vmatpush1.bf16.xpose.msra.mxu0 0
        %896 = vmatprep.subr.bf16.mxu0 0
        %897 = vmatpush1.bf16.xpose.msra.mxu0 0
        %898 = vmatprep.mubr.bf16.mxu0 0
        %899 = vmatmul.mubr.bf16.gmra.mrb[0].mxu0 %v861
        %v900 = vpop.f32.mrb[0].mxu0
        %v901 = vadd.f32 0.0, %v900
        %v902 = vpop.f32.mrb[0].mxu0
        %v903 = vpop.f32.mrb[0].mxu0
        %v904 = vadd.f32 0.0, %v903
        %v905 = vpop.f32.mrb[0].mxu0
        %906 = vdwg.mxu0
        %907 = vrot.lane.b32.xlu0 %v803, 96
        %v908 = vpop.permute.xlu0 %907
        %909 = vrot.lane.b32.xlu0 %v804, 96
        %v910 = vpop.permute.xlu0 %909
        %v912 = vsel %vm806, %v908, 0
        %v915 = vsel %vm806, %v910, 0
        %917 = vmatprep.subr.bf16.mxu0 0
        %918 = vmatpush1.bf16.xpose.msra.mxu0 %v915
        %919 = vmatprep.subr.bf16.mxu0 0
        %920 = vmatpush1.bf16.xpose.msra.mxu0 0
        %921 = vmatprep.subr.bf16.mxu0 0
        %922 = vmatpush1.bf16.xpose.msra.mxu0 0
        %923 = vmatprep.subr.bf16.mxu0 0
        %924 = vmatpush1.bf16.xpose.msra.mxu0 0
        %925 = vmatprep.subr.bf16.mxu0 0
        %926 = vmatpush1.bf16.xpose.msra.mxu0 0
        %927 = vmatprep.subr.bf16.mxu0 0
        %928 = vmatpush1.bf16.xpose.msra.mxu0 0
        %929 = vmatprep.subr.bf16.mxu0 0
        %930 = vmatpush1.bf16.xpose.msra.mxu0 0
        %931 = vmatprep.subr.bf16.mxu0 0
        %932 = vmatpush1.bf16.xpose.msra.mxu0 0
        %933 = vmatprep.subr.bf16.mxu0 0
        %934 = vmatpush1.bf16.xpose.msra.mxu0 0
        %935 = vmatprep.subr.bf16.mxu0 0
        %936 = vmatpush1.bf16.xpose.msra.mxu0 0
        %937 = vmatprep.subr.bf16.mxu0 0
        %938 = vmatpush1.bf16.xpose.msra.mxu0 0
        %939 = vmatprep.subr.bf16.mxu0 0
        %940 = vmatpush1.bf16.xpose.msra.mxu0 0
        %941 = vmatprep.subr.bf16.mxu0 0
        %942 = vmatpush1.bf16.xpose.msra.mxu0 0
        %943 = vmatprep.subr.bf16.mxu0 0
        %944 = vmatpush1.bf16.xpose.msra.mxu0 0
        %945 = vmatprep.subr.bf16.mxu0 0
        %946 = vmatpush1.bf16.xpose.msra.mxu0 0
        %947 = vmatprep.subr.bf16.mxu0 0
        %948 = vmatpush1.bf16.xpose.msra.mxu0 0
        %949 = vmatprep.mubr.bf16.mxu0 0
        %950 = vmatmul.mubr.bf16.gmra.mrb[0].mxu0 %v912
        %v951 = vpop.f32.mrb[0].mxu0
        %v952 = vadd.f32 0.0, %v951
        %v953 = vpop.f32.mrb[0].mxu0
        %v954 = vpop.f32.mrb[0].mxu0
        %v955 = vadd.f32 0.0, %v954
        %v956 = vpop.f32.mrb[0].mxu0
        %957 = vdwg.mxu0
        %958 = vrot.lane.b32.xlu0 %v803, 80
        %v959 = vpop.permute.xlu0 %958
        %960 = vrot.lane.b32.xlu0 %v804, 80
        %v961 = vpop.permute.xlu0 %960
        %v963 = vsel %vm806, %v959, 0
        %v966 = vsel %vm806, %v961, 0
        %968 = vmatprep.subr.bf16.mxu0 0
        %969 = vmatpush1.bf16.xpose.msra.mxu0 %v966
        %970 = vmatprep.subr.bf16.mxu0 0
        %971 = vmatpush1.bf16.xpose.msra.mxu0 0
        %972 = vmatprep.subr.bf16.mxu0 0
        %973 = vmatpush1.bf16.xpose.msra.mxu0 0
        %974 = vmatprep.subr.bf16.mxu0 0
        %975 = vmatpush1.bf16.xpose.msra.mxu0 0
        %976 = vmatprep.subr.bf16.mxu0 0
        %977 = vmatpush1.bf16.xpose.msra.mxu0 0
        %978 = vmatprep.subr.bf16.mxu0 0
        %979 = vmatpush1.bf16.xpose.msra.mxu0 0
        %980 = vmatprep.subr.bf16.mxu0 0
        %981 = vmatpush1.bf16.xpose.msra.mxu0 0
        %982 = vmatprep.subr.bf16.mxu0 0
        %983 = vmatpush1.bf16.xpose.msra.mxu0 0
        %984 = vmatprep.subr.bf16.mxu0 0
        %985 = vmatpush1.bf16.xpose.msra.mxu0 0
        %986 = vmatprep.subr.bf16.mxu0 0
        %987 = vmatpush1.bf16.xpose.msra.mxu0 0
        %988 = vmatprep.subr.bf16.mxu0 0
        %989 = vmatpush1.bf16.xpose.msra.mxu0 0
        %990 = vmatprep.subr.bf16.mxu0 0
        %991 = vmatpush1.bf16.xpose.msra.mxu0 0
        %992 = vmatprep.subr.bf16.mxu0 0
        %993 = vmatpush1.bf16.xpose.msra.mxu0 0
        %994 = vmatprep.subr.bf16.mxu0 0
        %995 = vmatpush1.bf16.xpose.msra.mxu0 0
        %996 = vmatprep.subr.bf16.mxu0 0
        %997 = vmatpush1.bf16.xpose.msra.mxu0 0
        %998 = vmatprep.subr.bf16.mxu0 0
        %999 = vmatpush1.bf16.xpose.msra.mxu0 0
        %1000 = vmatprep.mubr.bf16.mxu0 0
        %1001 = vmatmul.mubr.bf16.gmra.mrb[0].mxu0 %v963
        %v1002 = vpop.f32.mrb[0].mxu0
        %v1003 = vadd.f32 0.0, %v1002
        %v1004 = vpop.f32.mrb[0].mxu0
        %v1005 = vpop.f32.mrb[0].mxu0
        %v1006 = vadd.f32 0.0, %v1005
        %v1007 = vpop.f32.mrb[0].mxu0
        %1008 = vdwg.mxu0
        %1009 = vrot.lane.b32.xlu0 %v803, 64
        %v1010 = vpop.permute.xlu0 %1009
        %1011 = vrot.lane.b32.xlu0 %v804, 64
        %v1012 = vpop.permute.xlu0 %1011
        %v1014 = vsel %vm806, %v1010, 0
        %v1017 = vsel %vm806, %v1012, 0
        %1019 = vmatprep.subr.bf16.mxu0 0
        %1020 = vmatpush1.bf16.xpose.msra.mxu0 %v1017
        %1021 = vmatprep.subr.bf16.mxu0 0
        %1022 = vmatpush1.bf16.xpose.msra.mxu0 0
        %1023 = vmatprep.subr.bf16.mxu0 0
        %1024 = vmatpush1.bf16.xpose.msra.mxu0 0
        %1025 = vmatprep.subr.bf16.mxu0 0
        %1026 = vmatpush1.bf16.xpose.msra.mxu0 0
        %1027 = vmatprep.subr.bf16.mxu0 0
        %1028 = vmatpush1.bf16.xpose.msra.mxu0 0
        %1029 = vmatprep.subr.bf16.mxu0 0
        %1030 = vmatpush1.bf16.xpose.msra.mxu0 0
        %1031 = vmatprep.subr.bf16.mxu0 0
        %1032 = vmatpush1.bf16.xpose.msra.mxu0 0
        %1033 = vmatprep.subr.bf16.mxu0 0
        %1034 = vmatpush1.bf16.xpose.msra.mxu0 0
        %1035 = vmatprep.subr.bf16.mxu0 0
        %1036 = vmatpush1.bf16.xpose.msra.mxu0 0
        %1037 = vmatprep.subr.bf16.mxu0 0
        %1038 = vmatpush1.bf16.xpose.msra.mxu0 0
        %1039 = vmatprep.subr.bf16.mxu0 0
        %1040 = vmatpush1.bf16.xpose.msra.mxu0 0
        %1041 = vmatprep.subr.bf16.mxu0 0
        %1042 = vmatpush1.bf16.xpose.msra.mxu0 0
        %1043 = vmatprep.subr.bf16.mxu0 0
        %1044 = vmatpush1.bf16.xpose.msra.mxu0 0
        %1045 = vmatprep.subr.bf16.mxu0 0
        %1046 = vmatpush1.bf16.xpose.msra.mxu0 0
        %1047 = vmatprep.subr.bf16.mxu0 0
        %1048 = vmatpush1.bf16.xpose.msra.mxu0 0
        %1049 = vmatprep.subr.bf16.mxu0 0
        %1050 = vmatpush1.bf16.xpose.msra.mxu0 0
        %1051 = vmatprep.mubr.bf16.mxu0 0
        %1052 = vmatmul.mubr.bf16.gmra.mrb[0].mxu0 %v1014
        %v1053 = vpop.f32.mrb[0].mxu0
        %v1054 = vadd.f32 0.0, %v1053
        %v1055 = vpop.f32.mrb[0].mxu0
        %v1056 = vpop.f32.mrb[0].mxu0
        %v1057 = vadd.f32 0.0, %v1056
        %v1058 = vpop.f32.mrb[0].mxu0
        %1059 = vdwg.mxu0
        %1060 = vrot.lane.b32.xlu0 %v803, 48
        %v1061 = vpop.permute.xlu0 %1060
        %1062 = vrot.lane.b32.xlu0 %v804, 48
        %v1063 = vpop.permute.xlu0 %1062
        %v1065 = vsel %vm806, %v1061, 0
        %v1068 = vsel %vm806, %v1063, 0
        %1070 = vmatprep.subr.bf16.mxu0 0
        %1071 = vmatpush1.bf16.xpose.msra.mxu0 %v1068
        %1072 = vmatprep.subr.bf16.mxu0 0
        %1073 = vmatpush1.bf16.xpose.msra.mxu0 0
        %1074 = vmatprep.subr.bf16.mxu0 0
        %1075 = vmatpush1.bf16.xpose.msra.mxu0 0
        %1076 = vmatprep.subr.bf16.mxu0 0
        %1077 = vmatpush1.bf16.xpose.msra.mxu0 0
        %1078 = vmatprep.subr.bf16.mxu0 0
        %1079 = vmatpush1.bf16.xpose.msra.mxu0 0
        %1080 = vmatprep.subr.bf16.mxu0 0
        %1081 = vmatpush1.bf16.xpose.msra.mxu0 0
        %1082 = vmatprep.subr.bf16.mxu0 0
        %1083 = vmatpush1.bf16.xpose.msra.mxu0 0
        %1084 = vmatprep.subr.bf16.mxu0 0
        %1085 = vmatpush1.bf16.xpose.msra.mxu0 0
        %1086 = vmatprep.subr.bf16.mxu0 0
        %1087 = vmatpush1.bf16.xpose.msra.mxu0 0
        %1088 = vmatprep.subr.bf16.mxu0 0
        %1089 = vmatpush1.bf16.xpose.msra.mxu0 0
        %1090 = vmatprep.subr.bf16.mxu0 0
        %1091 = vmatpush1.bf16.xpose.msra.mxu0 0
        %1092 = vmatprep.subr.bf16.mxu0 0
        %1093 = vmatpush1.bf16.xpose.msra.mxu0 0
        %1094 = vmatprep.subr.bf16.mxu0 0
        %1095 = vmatpush1.bf16.xpose.msra.mxu0 0
        %1096 = vmatprep.subr.bf16.mxu0 0
        %1097 = vmatpush1.bf16.xpose.msra.mxu0 0
        %1098 = vmatprep.subr.bf16.mxu0 0
        %1099 = vmatpush1.bf16.xpose.msra.mxu0 0
        %1100 = vmatprep.subr.bf16.mxu0 0
        %1101 = vmatpush1.bf16.xpose.msra.mxu0 0
        %1102 = vmatprep.mubr.bf16.mxu0 0
        %1103 = vmatmul.mubr.bf16.gmra.mrb[0].mxu0 %v1065
        %v1104 = vpop.f32.mrb[0].mxu0
        %v1105 = vadd.f32 0.0, %v1104
        %v1106 = vpop.f32.mrb[0].mxu0
        %v1107 = vpop.f32.mrb[0].mxu0
        %v1108 = vadd.f32 0.0, %v1107
        %v1109 = vpop.f32.mrb[0].mxu0
        %1110 = vdwg.mxu0
        %1111 = vrot.lane.b32.xlu0 %v803, 32
        %v1112 = vpop.permute.xlu0 %1111
        %1113 = vrot.lane.b32.xlu0 %v804, 32
        %v1114 = vpop.permute.xlu0 %1113
        %v1116 = vsel %vm806, %v1112, 0
        %v1119 = vsel %vm806, %v1114, 0
        %1121 = vmatprep.subr.bf16.mxu0 0
        %1122 = vmatpush1.bf16.xpose.msra.mxu0 %v1119
        %1123 = vmatprep.subr.bf16.mxu0 0
        %1124 = vmatpush1.bf16.xpose.msra.mxu0 0
        %1125 = vmatprep.subr.bf16.mxu0 0
        %1126 = vmatpush1.bf16.xpose.msra.mxu0 0
        %1127 = vmatprep.subr.bf16.mxu0 0
        %1128 = vmatpush1.bf16.xpose.msra.mxu0 0
        %1129 = vmatprep.subr.bf16.mxu0 0
        %1130 = vmatpush1.bf16.xpose.msra.mxu0 0
        %1131 = vmatprep.subr.bf16.mxu0 0
        %1132 = vmatpush1.bf16.xpose.msra.mxu0 0
        %1133 = vmatprep.subr.bf16.mxu0 0
        %1134 = vmatpush1.bf16.xpose.msra.mxu0 0
        %1135 = vmatprep.subr.bf16.mxu0 0
        %1136 = vmatpush1.bf16.xpose.msra.mxu0 0
        %1137 = vmatprep.subr.bf16.mxu0 0
        %1138 = vmatpush1.bf16.xpose.msra.mxu0 0
        %1139 = vmatprep.subr.bf16.mxu0 0
        %1140 = vmatpush1.bf16.xpose.msra.mxu0 0
        %1141 = vmatprep.subr.bf16.mxu0 0
        %1142 = vmatpush1.bf16.xpose.msra.mxu0 0
        %1143 = vmatprep.subr.bf16.mxu0 0
        %1144 = vmatpush1.bf16.xpose.msra.mxu0 0
        %1145 = vmatprep.subr.bf16.mxu0 0
        %1146 = vmatpush1.bf16.xpose.msra.mxu0 0
        %1147 = vmatprep.subr.bf16.mxu0 0
        %1148 = vmatpush1.bf16.xpose.msra.mxu0 0
        %1149 = vmatprep.subr.bf16.mxu0 0
        %1150 = vmatpush1.bf16.xpose.msra.mxu0 0
        %1151 = vmatprep.subr.bf16.mxu0 0
        %1152 = vmatpush1.bf16.xpose.msra.mxu0 0
        %1153 = vmatprep.mubr.bf16.mxu0 0
        %1154 = vmatmul.mubr.bf16.gmra.mrb[0].mxu0 %v1116
        %v1155 = vpop.f32.mrb[0].mxu0
        %v1156 = vadd.f32 0.0, %v1155
        %v1157 = vpop.f32.mrb[0].mxu0
        %v1158 = vpop.f32.mrb[0].mxu0
        %v1159 = vadd.f32 0.0, %v1158
        %v1160 = vpop.f32.mrb[0].mxu0
        %1161 = vdwg.mxu0
        %1162 = vrot.lane.b32.xlu0 %v803, 16
        %v1163 = vpop.permute.xlu0 %1162
        %1164 = vrot.lane.b32.xlu0 %v804, 16
        %v1165 = vpop.permute.xlu0 %1164
        %v1167 = vsel %vm806, %v1163, 0
        %v1170 = vsel %vm806, %v1165, 0
        %1172 = vmatprep.subr.bf16.mxu0 0
        %1173 = vmatpush1.bf16.xpose.msra.mxu0 %v1170
        %1174 = vmatprep.subr.bf16.mxu0 0
        %1175 = vmatpush1.bf16.xpose.msra.mxu0 0
        %1176 = vmatprep.subr.bf16.mxu0 0
        %1177 = vmatpush1.bf16.xpose.msra.mxu0 0
        %1178 = vmatprep.subr.bf16.mxu0 0
        %1179 = vmatpush1.bf16.xpose.msra.mxu0 0
        %1180 = vmatprep.subr.bf16.mxu0 0
        %1181 = vmatpush1.bf16.xpose.msra.mxu0 0
        %1182 = vmatprep.subr.bf16.mxu0 0
        %1183 = vmatpush1.bf16.xpose.msra.mxu0 0
        %1184 = vmatprep.subr.bf16.mxu0 0
        %1185 = vmatpush1.bf16.xpose.msra.mxu0 0
        %1186 = vmatprep.subr.bf16.mxu0 0
        %1187 = vmatpush1.bf16.xpose.msra.mxu0 0
        %1188 = vmatprep.subr.bf16.mxu0 0
        %1189 = vmatpush1.bf16.xpose.msra.mxu0 0
        %1190 = vmatprep.subr.bf16.mxu0 0
        %1191 = vmatpush1.bf16.xpose.msra.mxu0 0
        %1192 = vmatprep.subr.bf16.mxu0 0
        %1193 = vmatpush1.bf16.xpose.msra.mxu0 0
        %1194 = vmatprep.subr.bf16.mxu0 0
        %1195 = vmatpush1.bf16.xpose.msra.mxu0 0
        %1196 = vmatprep.subr.bf16.mxu0 0
        %1197 = vmatpush1.bf16.xpose.msra.mxu0 0
        %1198 = vmatprep.subr.bf16.mxu0 0
        %1199 = vmatpush1.bf16.xpose.msra.mxu0 0
        %1200 = vmatprep.subr.bf16.mxu0 0
        %1201 = vmatpush1.bf16.xpose.msra.mxu0 0
        %1202 = vmatprep.subr.bf16.mxu0 0
        %1203 = vmatpush1.bf16.xpose.msra.mxu0 0
        %1204 = vmatprep.mubr.bf16.mxu0 0
        %1205 = vmatmul.mubr.bf16.gmra.mrb[0].mxu0 %v1167
        %v1206 = vpop.f32.mrb[0].mxu0
        %v1207 = vadd.f32 0.0, %v1206
        %v1208 = vpop.f32.mrb[0].mxu0
        %v1209 = vpop.f32.mrb[0].mxu0
        %v1210 = vadd.f32 0.0, %v1209
        %v1211 = vpop.f32.mrb[0].mxu0
        %1212 = vdwg.mxu0
        %v1213 = vmul.f32 %v848, 0.25
        %v1214 = vmul.f32 %v851, 0.25
        %v1215 = vmul.f32 %v901, 0.25
        %v1216 = vmul.f32 %v904, 0.25
        %v1217 = vmul.f32 %v952, 0.25
        %v1218 = vmul.f32 %v955, 0.25
        %v1219 = vmul.f32 %v1003, 0.25
        %v1220 = vmul.f32 %v1006, 0.25
        %v1221 = vmul.f32 %v1054, 0.25
        %v1222 = vmul.f32 %v1057, 0.25
        %v1223 = vmul.f32 %v1105, 0.25
        %v1224 = vmul.f32 %v1108, 0.25
        %v1225 = vmul.f32 %v1156, 0.25
        %v1226 = vmul.f32 %v1159, 0.25
        %v1227 = vmul.f32 %v1207, 0.25
        %v1228 = vmul.f32 %v1210, 0.25
        %v1229 = vsel %vm806, %v1213, -inf
        %v1230 = vsel %vm806, %v1215, -inf
        %v1231 = vsel %vm806, %v1217, -inf
        %v1232 = vmax.f32 %v1229, %v1231
        %v1233 = vsel %vm806, %v1219, -inf
        %v1234 = vmax.f32 %v1230, %v1233
        %v1235 = vsel %vm806, %v1221, -inf
        %v1236 = vmax.f32 %v1232, %v1235
        %v1237 = vsel %vm806, %v1223, -inf
        %v1238 = vmax.f32 %v1234, %v1237
        %v1239 = vsel %vm806, %v1225, -inf
        %v1240 = vmax.f32 %v1236, %v1239
        %v1241 = vsel %vm806, %v1227, -inf
        %v1242 = vmax.f32 %v1238, %v1241
        %v1243 = vmax.f32 %v1240, %v1242
        %v1244 = vsel %vm806, %v1214, -inf
        %v1245 = vsel %vm806, %v1216, -inf
        %v1246 = vsel %vm806, %v1218, -inf
        %v1247 = vmax.f32 %v1244, %v1246
        %v1248 = vsel %vm806, %v1220, -inf
        %v1249 = vmax.f32 %v1245, %v1248
        %v1250 = vsel %vm806, %v1222, -inf
        %v1251 = vmax.f32 %v1247, %v1250
        %v1252 = vsel %vm806, %v1224, -inf
        %v1253 = vmax.f32 %v1249, %v1252
        %v1254 = vsel %vm806, %v1226, -inf
        %v1255 = vmax.f32 %v1251, %v1254
        %v1256 = vsel %vm806, %v1228, -inf
        %v1257 = vmax.f32 %v1253, %v1256
        %v1258 = vmax.f32 %v1255, %v1257
        %v1259 = vsub.f32 %v1213, %v1243
        %v1260 = vsub.f32 %v1214, %v1258
        %v1261 = vsub.f32 %v1215, %v1243
        %v1262 = vsub.f32 %v1216, %v1258
        %v1263 = vsub.f32 %v1217, %v1243
        %v1264 = vsub.f32 %v1218, %v1258
        %v1265 = vsub.f32 %v1219, %v1243
        %v1266 = vsub.f32 %v1220, %v1258
        %v1267 = vsub.f32 %v1221, %v1243
        %v1268 = vsub.f32 %v1222, %v1258
        %v1269 = vsub.f32 %v1223, %v1243
        %v1270 = vsub.f32 %v1224, %v1258
        %v1271 = vsub.f32 %v1225, %v1243
        %v1272 = vsub.f32 %v1226, %v1258
        %v1273 = vsub.f32 %v1227, %v1243
        %v1274 = vsub.f32 %v1228, %v1258
        %v1275 = vmul.f32 %v1259, 1.442695
        %v1276 = vpow.pop %v1275
        %v1277 = vmul.f32 %v1260, 1.442695
        %v1278 = vpow.pop %v1277
        %v1279 = vmul.f32 %v1261, 1.442695
        %v1280 = vpow.pop %v1279
        %v1281 = vmul.f32 %v1262, 1.442695
        %v1282 = vpow.pop %v1281
        %v1283 = vmul.f32 %v1263, 1.442695
        %v1284 = vpow.pop %v1283
        %v1285 = vmul.f32 %v1264, 1.442695
        %v1286 = vpow.pop %v1285
        %v1287 = vmul.f32 %v1265, 1.442695
        %v1288 = vpow.pop %v1287
        %v1289 = vmul.f32 %v1266, 1.442695
        %v1290 = vpow.pop %v1289
        %v1291 = vmul.f32 %v1267, 1.442695
        %v1292 = vpow.pop %v1291
        %v1293 = vmul.f32 %v1268, 1.442695
        %v1294 = vpow.pop %v1293
        %v1295 = vmul.f32 %v1269, 1.442695
        %v1296 = vpow.pop %v1295
        %v1297 = vmul.f32 %v1270, 1.442695
        %v1298 = vpow.pop %v1297
        %v1299 = vmul.f32 %v1271, 1.442695
        %v1300 = vpow.pop %v1299
        %v1301 = vmul.f32 %v1272, 1.442695
        %v1302 = vpow.pop %v1301
        %v1303 = vmul.f32 %v1273, 1.442695
        %v1304 = vpow.pop %v1303
        %v1305 = vmul.f32 %v1274, 1.442695
        %v1306 = vpow.pop %v1305
        %v1307 = vsel %vm806, %v1276, 0.0
        %v1308 = vsel %vm806, %v1280, 0.0
        %v1309 = vadd.f32 %v1307, %v1308
        %v1310 = vsel %vm806, %v1284, 0.0
        %v1311 = vadd.f32 %v1309, %v1310
        %v1312 = vsel %vm806, %v1288, 0.0
        %v1313 = vadd.f32 %v1311, %v1312
        %v1314 = vsel %vm806, %v1292, 0.0
        %v1315 = vadd.f32 %v1313, %v1314
        %v1316 = vsel %vm806, %v1296, 0.0
        %v1317 = vadd.f32 %v1315, %v1316
        %v1318 = vsel %vm806, %v1300, 0.0
        %v1319 = vadd.f32 %v1317, %v1318
        %v1320 = vsel %vm806, %v1304, 0.0
        %v1321 = vadd.f32 %v1319, %v1320
        %v1322 = vsel %vm806, %v1278, 0.0
        %v1323 = vsel %vm806, %v1282, 0.0
        %v1324 = vadd.f32 %v1322, %v1323
        %v1325 = vsel %vm806, %v1286, 0.0
        %v1326 = vadd.f32 %v1324, %v1325
        %v1327 = vsel %vm806, %v1290, 0.0
        %v1328 = vadd.f32 %v1326, %v1327
        %v1329 = vsel %vm806, %v1294, 0.0
        %v1330 = vadd.f32 %v1328, %v1329
        %v1331 = vsel %vm806, %v1298, 0.0
        %v1332 = vadd.f32 %v1330, %v1331
        %v1333 = vsel %vm806, %v1302, 0.0
        %v1334 = vadd.f32 %v1332, %v1333
        %v1335 = vsel %vm806, %v1306, 0.0
        %v1336 = vadd.f32 %v1334, %v1335
        %v1337 = vrcp.pop %v1321
        %v1338 = vrcp.pop %v1336
        %v1339 = vmul.f32 %v1276, %v1337
        %v1340 = vmul.f32 %v1278, %v1338
        %v1341 = vmul.f32 %v1280, %v1337
        %v1342 = vmul.f32 %v1282, %v1338
        %v1343 = vmul.f32 %v1284, %v1337
        %v1344 = vmul.f32 %v1286, %v1338
        %v1345 = vmul.f32 %v1288, %v1337
        %v1346 = vmul.f32 %v1290, %v1338
        %v1347 = vmul.f32 %v1292, %v1337
        %v1348 = vmul.f32 %v1294, %v1338
        %v1349 = vmul.f32 %v1296, %v1337
        %v1350 = vmul.f32 %v1298, %v1338
        %v1351 = vmul.f32 %v1300, %v1337
        %v1352 = vmul.f32 %v1302, %v1338
        %v1353 = vmul.f32 %v1304, %v1337
        %v1354 = vmul.f32 %v1306, %v1338
        %v1355 = vpack.c.bf16 %v1340, %v1339
        %v1357 = vsel %vm806, %v1355, 0
        %1359 = vmatprep.subr.bf16.mxu0 0
        %1360 = vmatpush1.bf16.msra.mxu0 %v805
        %1361 = vmatprep.subr.bf16.mxu0 0
        %1362 = vmatpush1.bf16.msra.mxu0 0
        %1363 = vmatprep.subr.bf16.mxu0 0
        %1364 = vmatpush1.bf16.msra.mxu0 0
        %1365 = vmatprep.subr.bf16.mxu0 0
        %1366 = vmatpush1.bf16.msra.mxu0 0
        %1367 = vmatprep.subr.bf16.mxu0 0
        %1368 = vmatpush1.bf16.msra.mxu0 0
        %1369 = vmatprep.subr.bf16.mxu0 0
        %1370 = vmatpush1.bf16.msra.mxu0 0
        %1371 = vmatprep.subr.bf16.mxu0 0
        %1372 = vmatpush1.bf16.msra.mxu0 0
        %1373 = vmatprep.subr.bf16.mxu0 0
        %1374 = vmatpush1.bf16.msra.mxu0 0
        %1375 = vmatprep.subr.bf16.mxu0 0
        %1376 = vmatpush1.bf16.msra.mxu0 0
        %1377 = vmatprep.subr.bf16.mxu0 0
        %1378 = vmatpush1.bf16.msra.mxu0 0
        %1379 = vmatprep.subr.bf16.mxu0 0
        %1380 = vmatpush1.bf16.msra.mxu0 0
        %1381 = vmatprep.subr.bf16.mxu0 0
        %1382 = vmatpush1.bf16.msra.mxu0 0
        %1383 = vmatprep.subr.bf16.mxu0 0
        %1384 = vmatpush1.bf16.msra.mxu0 0
        %1385 = vmatprep.subr.bf16.mxu0 0
        %1386 = vmatpush1.bf16.msra.mxu0 0
        %1387 = vmatprep.subr.bf16.mxu0 0
        %1388 = vmatpush1.bf16.msra.mxu0 0
        %1389 = vmatprep.subr.bf16.mxu0 0
        %1390 = vmatpush1.bf16.msra.mxu0 0
        %1391 = vmatprep.mubr.bf16.mxu0 0
        %1392 = vmatmul.mubr.bf16.gmra.mrb[0].mxu0 %v1357
        %v1393 = vpop.f32.mrb[0].mxu0
        %v1394 = vadd.f32 0.0, %v1393
        %v1395 = vpop.f32.mrb[0].mxu0
        %v1396 = vpop.f32.mrb[0].mxu0
        %v1397 = vadd.f32 0.0, %v1396
        %v1398 = vpop.f32.mrb[0].mxu0
        %1399 = vdwg.mxu0
        %1400 = vst.msk [vmem:[#allocation2] sm:$0xff] %vm806, %v1394
        %1401 = vst.msk [vmem:[#allocation2 + $0x8] sm:$0xff] %vm806, %v1397
        %v1402 = vpack.c.bf16 %v1342, %v1341
        %1404 = vrot.lane.b32.xlu0 %v805, 112
        %v1405 = vpop.permute.xlu0 %1404
        %v1408 = vsel %vm806, %v1402, 0
        %1410 = vmatprep.subr.bf16.mxu0 0
        %1411 = vmatpush1.bf16.msra.mxu0 %v1405
        %1412 = vmatprep.subr.bf16.mxu0 0
        %1413 = vmatpush1.bf16.msra.mxu0 0
        %1414 = vmatprep.subr.bf16.mxu0 0
        %1415 = vmatpush1.bf16.msra.mxu0 0
        %1416 = vmatprep.subr.bf16.mxu0 0
        %1417 = vmatpush1.bf16.msra.mxu0 0
        %1418 = vmatprep.subr.bf16.mxu0 0
        %1419 = vmatpush1.bf16.msra.mxu0 0
        %1420 = vmatprep.subr.bf16.mxu0 0
        %1421 = vmatpush1.bf16.msra.mxu0 0
        %1422 = vmatprep.subr.bf16.mxu0 0
        %1423 = vmatpush1.bf16.msra.mxu0 0
        %1424 = vmatprep.subr.bf16.mxu0 0
        %1425 = vmatpush1.bf16.msra.mxu0 0
        %1426 = vmatprep.subr.bf16.mxu0 0
        %1427 = vmatpush1.bf16.msra.mxu0 0
        %1428 = vmatprep.subr.bf16.mxu0 0
        %1429 = vmatpush1.bf16.msra.mxu0 0
        %1430 = vmatprep.subr.bf16.mxu0 0
        %1431 = vmatpush1.bf16.msra.mxu0 0
        %1432 = vmatprep.subr.bf16.mxu0 0
        %1433 = vmatpush1.bf16.msra.mxu0 0
        %1434 = vmatprep.subr.bf16.mxu0 0
        %1435 = vmatpush1.bf16.msra.mxu0 0
        %1436 = vmatprep.subr.bf16.mxu0 0
        %1437 = vmatpush1.bf16.msra.mxu0 0
        %1438 = vmatprep.subr.bf16.mxu0 0
        %1439 = vmatpush1.bf16.msra.mxu0 0
        %1440 = vmatprep.subr.bf16.mxu0 0
        %1441 = vmatpush1.bf16.msra.mxu0 0
        %1442 = vmatprep.mubr.bf16.mxu0 0
        %1443 = vmatmul.mubr.bf16.gmra.mrb[0].mxu0 %v1408
        %v1444 = vpop.f32.mrb[0].mxu0
        %v1445 = vadd.f32 0.0, %v1444
        %v1446 = vpop.f32.mrb[0].mxu0
        %v1447 = vpop.f32.mrb[0].mxu0
        %v1448 = vadd.f32 0.0, %v1447
        %v1449 = vpop.f32.mrb[0].mxu0
        %1450 = vdwg.mxu0
        %1451 = vst.msk [vmem:[#allocation2 + $0x10] sm:$0xff] %vm806, %v1445
        %1452 = vst.msk [vmem:[#allocation2 + $0x18] sm:$0xff] %vm806, %v1448
        %v1453 = vpack.c.bf16 %v1344, %v1343
        %1454 = vrot.lane.b32.xlu0 %v805, 96
        %v1455 = vpop.permute.xlu0 %1454
        %v1458 = vsel %vm806, %v1453, 0
        %1460 = vmatprep.subr.bf16.mxu0 0
        %1461 = vmatpush1.bf16.msra.mxu0 %v1455
        %1462 = vmatprep.subr.bf16.mxu0 0
        %1463 = vmatpush1.bf16.msra.mxu0 0
        %1464 = vmatprep.subr.bf16.mxu0 0
        %1465 = vmatpush1.bf16.msra.mxu0 0
        %1466 = vmatprep.subr.bf16.mxu0 0
        %1467 = vmatpush1.bf16.msra.mxu0 0
        %1468 = vmatprep.subr.bf16.mxu0 0
        %1469 = vmatpush1.bf16.msra.mxu0 0
        %1470 = vmatprep.subr.bf16.mxu0 0
        %1471 = vmatpush1.bf16.msra.mxu0 0
        %1472 = vmatprep.subr.bf16.mxu0 0
        %1473 = vmatpush1.bf16.msra.mxu0 0
        %1474 = vmatprep.subr.bf16.mxu0 0
        %1475 = vmatpush1.bf16.msra.mxu0 0
        %1476 = vmatprep.subr.bf16.mxu0 0
        %1477 = vmatpush1.bf16.msra.mxu0 0
        %1478 = vmatprep.subr.bf16.mxu0 0
        %1479 = vmatpush1.bf16.msra.mxu0 0
        %1480 = vmatprep.subr.bf16.mxu0 0
        %1481 = vmatpush1.bf16.msra.mxu0 0
        %1482 = vmatprep.subr.bf16.mxu0 0
        %1483 = vmatpush1.bf16.msra.mxu0 0
        %1484 = vmatprep.subr.bf16.mxu0 0
        %1485 = vmatpush1.bf16.msra.mxu0 0
        %1486 = vmatprep.subr.bf16.mxu0 0
        %1487 = vmatpush1.bf16.msra.mxu0 0
        %1488 = vmatprep.subr.bf16.mxu0 0
        %1489 = vmatpush1.bf16.msra.mxu0 0
        %1490 = vmatprep.subr.bf16.mxu0 0
        %1491 = vmatpush1.bf16.msra.mxu0 0
        %1492 = vmatprep.mubr.bf16.mxu0 0
        %1493 = vmatmul.mubr.bf16.gmra.mrb[0].mxu0 %v1458
        %v1494 = vpop.f32.mrb[0].mxu0
        %v1495 = vadd.f32 0.0, %v1494
        %v1496 = vpop.f32.mrb[0].mxu0
        %v1497 = vpop.f32.mrb[0].mxu0
        %v1498 = vadd.f32 0.0, %v1497
        %v1499 = vpop.f32.mrb[0].mxu0
        %1500 = vdwg.mxu0
        %1501 = vst.msk [vmem:[#allocation2 + $0x20] sm:$0xff] %vm806, %v1495
        %1502 = vst.msk [vmem:[#allocation2 + $0x28] sm:$0xff] %vm806, %v1498
        %v1503 = vpack.c.bf16 %v1346, %v1345
        %1504 = vrot.lane.b32.xlu0 %v805, 80
        %v1505 = vpop.permute.xlu0 %1504
        %v1508 = vsel %vm806, %v1503, 0
        %1510 = vmatprep.subr.bf16.mxu0 0
        %1511 = vmatpush1.bf16.msra.mxu0 %v1505
        %1512 = vmatprep.subr.bf16.mxu0 0
        %1513 = vmatpush1.bf16.msra.mxu0 0
        %1514 = vmatprep.subr.bf16.mxu0 0
        %1515 = vmatpush1.bf16.msra.mxu0 0
        %1516 = vmatprep.subr.bf16.mxu0 0
        %1517 = vmatpush1.bf16.msra.mxu0 0
        %1518 = vmatprep.subr.bf16.mxu0 0
        %1519 = vmatpush1.bf16.msra.mxu0 0
        %1520 = vmatprep.subr.bf16.mxu0 0
        %1521 = vmatpush1.bf16.msra.mxu0 0
        %1522 = vmatprep.subr.bf16.mxu0 0
        %1523 = vmatpush1.bf16.msra.mxu0 0
        %1524 = vmatprep.subr.bf16.mxu0 0
        %1525 = vmatpush1.bf16.msra.mxu0 0
        %1526 = vmatprep.subr.bf16.mxu0 0
        %1527 = vmatpush1.bf16.msra.mxu0 0
        %1528 = vmatprep.subr.bf16.mxu0 0
        %1529 = vmatpush1.bf16.msra.mxu0 0
        %1530 = vmatprep.subr.bf16.mxu0 0
        %1531 = vmatpush1.bf16.msra.mxu0 0
        %1532 = vmatprep.subr.bf16.mxu0 0
        %1533 = vmatpush1.bf16.msra.mxu0 0
        %1534 = vmatprep.subr.bf16.mxu0 0
        %1535 = vmatpush1.bf16.msra.mxu0 0
        %1536 = vmatprep.subr.bf16.mxu0 0
        %1537 = vmatpush1.bf16.msra.mxu0 0
        %1538 = vmatprep.subr.bf16.mxu0 0
        %1539 = vmatpush1.bf16.msra.mxu0 0
        %1540 = vmatprep.subr.bf16.mxu0 0
        %1541 = vmatpush1.bf16.msra.mxu0 0
        %1542 = vmatprep.mubr.bf16.mxu0 0
        %1543 = vmatmul.mubr.bf16.gmra.mrb[0].mxu0 %v1508
        %v1544 = vpop.f32.mrb[0].mxu0
        %v1545 = vadd.f32 0.0, %v1544
        %v1546 = vpop.f32.mrb[0].mxu0
        %v1547 = vpop.f32.mrb[0].mxu0
        %v1548 = vadd.f32 0.0, %v1547
        %v1549 = vpop.f32.mrb[0].mxu0
        %1550 = vdwg.mxu0
        %1551 = vst.msk [vmem:[#allocation2 + $0x30] sm:$0xff] %vm806, %v1545
        %1552 = vst.msk [vmem:[#allocation2 + $0x38] sm:$0xff] %vm806, %v1548
        %v1553 = vpack.c.bf16 %v1348, %v1347
        %1554 = vrot.lane.b32.xlu0 %v805, 64
        %v1555 = vpop.permute.xlu0 %1554
        %v1558 = vsel %vm806, %v1553, 0
        %1560 = vmatprep.subr.bf16.mxu0 0
        %1561 = vmatpush1.bf16.msra.mxu0 %v1555
        %1562 = vmatprep.subr.bf16.mxu0 0
        %1563 = vmatpush1.bf16.msra.mxu0 0
        %1564 = vmatprep.subr.bf16.mxu0 0
        %1565 = vmatpush1.bf16.msra.mxu0 0
        %1566 = vmatprep.subr.bf16.mxu0 0
        %1567 = vmatpush1.bf16.msra.mxu0 0
        %1568 = vmatprep.subr.bf16.mxu0 0
        %1569 = vmatpush1.bf16.msra.mxu0 0
        %1570 = vmatprep.subr.bf16.mxu0 0
        %1571 = vmatpush1.bf16.msra.mxu0 0
        %1572 = vmatprep.subr.bf16.mxu0 0
        %1573 = vmatpush1.bf16.msra.mxu0 0
        %1574 = vmatprep.subr.bf16.mxu0 0
        %1575 = vmatpush1.bf16.msra.mxu0 0
        %1576 = vmatprep.subr.bf16.mxu0 0
        %1577 = vmatpush1.bf16.msra.mxu0 0
        %1578 = vmatprep.subr.bf16.mxu0 0
        %1579 = vmatpush1.bf16.msra.mxu0 0
        %1580 = vmatprep.subr.bf16.mxu0 0
        %1581 = vmatpush1.bf16.msra.mxu0 0
        %1582 = vmatprep.subr.bf16.mxu0 0
        %1583 = vmatpush1.bf16.msra.mxu0 0
        %1584 = vmatprep.subr.bf16.mxu0 0
        %1585 = vmatpush1.bf16.msra.mxu0 0
        %1586 = vmatprep.subr.bf16.mxu0 0
        %1587 = vmatpush1.bf16.msra.mxu0 0
        %1588 = vmatprep.subr.bf16.mxu0 0
        %1589 = vmatpush1.bf16.msra.mxu0 0
        %1590 = vmatprep.subr.bf16.mxu0 0
        %1591 = vmatpush1.bf16.msra.mxu0 0
        %1592 = vmatprep.mubr.bf16.mxu0 0
        %1593 = vmatmul.mubr.bf16.gmra.mrb[0].mxu0 %v1558
        %v1594 = vpop.f32.mrb[0].mxu0
        %v1595 = vadd.f32 0.0, %v1594
        %v1596 = vpop.f32.mrb[0].mxu0
        %v1597 = vpop.f32.mrb[0].mxu0
        %v1598 = vadd.f32 0.0, %v1597
        %v1599 = vpop.f32.mrb[0].mxu0
        %1600 = vdwg.mxu0
        %1601 = vst.msk [vmem:[#allocation2 + $0x40] sm:$0xff] %vm806, %v1595
        %1602 = vst.msk [vmem:[#allocation2 + $0x48] sm:$0xff] %vm806, %v1598
        %v1603 = vpack.c.bf16 %v1350, %v1349
        %1604 = vrot.lane.b32.xlu0 %v805, 48
        %v1605 = vpop.permute.xlu0 %1604
        %v1608 = vsel %vm806, %v1603, 0
        %1610 = vmatprep.subr.bf16.mxu0 0
        %1611 = vmatpush1.bf16.msra.mxu0 %v1605
        %1612 = vmatprep.subr.bf16.mxu0 0
        %1613 = vmatpush1.bf16.msra.mxu0 0
        %1614 = vmatprep.subr.bf16.mxu0 0
        %1615 = vmatpush1.bf16.msra.mxu0 0
        %1616 = vmatprep.subr.bf16.mxu0 0
        %1617 = vmatpush1.bf16.msra.mxu0 0
        %1618 = vmatprep.subr.bf16.mxu0 0
        %1619 = vmatpush1.bf16.msra.mxu0 0
        %1620 = vmatprep.subr.bf16.mxu0 0
        %1621 = vmatpush1.bf16.msra.mxu0 0
        %1622 = vmatprep.subr.bf16.mxu0 0
        %1623 = vmatpush1.bf16.msra.mxu0 0
        %1624 = vmatprep.subr.bf16.mxu0 0
        %1625 = vmatpush1.bf16.msra.mxu0 0
        %1626 = vmatprep.subr.bf16.mxu0 0
        %1627 = vmatpush1.bf16.msra.mxu0 0
        %1628 = vmatprep.subr.bf16.mxu0 0
        %1629 = vmatpush1.bf16.msra.mxu0 0
        %1630 = vmatprep.subr.bf16.mxu0 0
        %1631 = vmatpush1.bf16.msra.mxu0 0
        %1632 = vmatprep.subr.bf16.mxu0 0
        %1633 = vmatpush1.bf16.msra.mxu0 0
        %1634 = vmatprep.subr.bf16.mxu0 0
        %1635 = vmatpush1.bf16.msra.mxu0 0
        %1636 = vmatprep.subr.bf16.mxu0 0
        %1637 = vmatpush1.bf16.msra.mxu0 0
        %1638 = vmatprep.subr.bf16.mxu0 0
        %1639 = vmatpush1.bf16.msra.mxu0 0
        %1640 = vmatprep.subr.bf16.mxu0 0
        %1641 = vmatpush1.bf16.msra.mxu0 0
        %1642 = vmatprep.mubr.bf16.mxu0 0
        %1643 = vmatmul.mubr.bf16.gmra.mrb[0].mxu0 %v1608
        %v1644 = vpop.f32.mrb[0].mxu0
        %v1645 = vadd.f32 0.0, %v1644
        %v1646 = vpop.f32.mrb[0].mxu0
        %v1647 = vpop.f32.mrb[0].mxu0
        %v1648 = vadd.f32 0.0, %v1647
        %v1649 = vpop.f32.mrb[0].mxu0
        %1650 = vdwg.mxu0
        %1651 = vst.msk [vmem:[#allocation2 + $0x50] sm:$0xff] %vm806, %v1645
        %1652 = vst.msk [vmem:[#allocation2 + $0x58] sm:$0xff] %vm806, %v1648
        %v1653 = vpack.c.bf16 %v1352, %v1351
        %1654 = vrot.lane.b32.xlu0 %v805, 32
        %v1655 = vpop.permute.xlu0 %1654
        %v1658 = vsel %vm806, %v1653, 0
        %1660 = vmatprep.subr.bf16.mxu0 0
        %1661 = vmatpush1.bf16.msra.mxu0 %v1655
        %1662 = vmatprep.subr.bf16.mxu0 0
        %1663 = vmatpush1.bf16.msra.mxu0 0
        %1664 = vmatprep.subr.bf16.mxu0 0
        %1665 = vmatpush1.bf16.msra.mxu0 0
        %1666 = vmatprep.subr.bf16.mxu0 0
        %1667 = vmatpush1.bf16.msra.mxu0 0
        %1668 = vmatprep.subr.bf16.mxu0 0
        %1669 = vmatpush1.bf16.msra.mxu0 0
        %1670 = vmatprep.subr.bf16.mxu0 0
        %1671 = vmatpush1.bf16.msra.mxu0 0
        %1672 = vmatprep.subr.bf16.mxu0 0
        %1673 = vmatpush1.bf16.msra.mxu0 0
        %1674 = vmatprep.subr.bf16.mxu0 0
        %1675 = vmatpush1.bf16.msra.mxu0 0
        %1676 = vmatprep.subr.bf16.mxu0 0
        %1677 = vmatpush1.bf16.msra.mxu0 0
        %1678 = vmatprep.subr.bf16.mxu0 0
        %1679 = vmatpush1.bf16.msra.mxu0 0
        %1680 = vmatprep.subr.bf16.mxu0 0
        %1681 = vmatpush1.bf16.msra.mxu0 0
        %1682 = vmatprep.subr.bf16.mxu0 0
        %1683 = vmatpush1.bf16.msra.mxu0 0
        %1684 = vmatprep.subr.bf16.mxu0 0
        %1685 = vmatpush1.bf16.msra.mxu0 0
        %1686 = vmatprep.subr.bf16.mxu0 0
        %1687 = vmatpush1.bf16.msra.mxu0 0
        %1688 = vmatprep.subr.bf16.mxu0 0
        %1689 = vmatpush1.bf16.msra.mxu0 0
        %1690 = vmatprep.subr.bf16.mxu0 0
        %1691 = vmatpush1.bf16.msra.mxu0 0
        %1692 = vmatprep.mubr.bf16.mxu0 0
        %1693 = vmatmul.mubr.bf16.gmra.mrb[0].mxu0 %v1658
        %v1694 = vpop.f32.mrb[0].mxu0
        %v1695 = vadd.f32 0.0, %v1694
        %v1696 = vpop.f32.mrb[0].mxu0
        %v1697 = vpop.f32.mrb[0].mxu0
        %v1698 = vadd.f32 0.0, %v1697
        %v1699 = vpop.f32.mrb[0].mxu0
        %1700 = vdwg.mxu0
        %1701 = vst.msk [vmem:[#allocation2 + $0x60] sm:$0xff] %vm806, %v1695
        %1702 = vst.msk [vmem:[#allocation2 + $0x68] sm:$0xff] %vm806, %v1698
        %v1703 = vpack.c.bf16 %v1354, %v1353
        %1704 = vrot.lane.b32.xlu0 %v805, 16
        %v1705 = vpop.permute.xlu0 %1704
        %v1708 = vsel %vm806, %v1703, 0
        %1710 = vmatprep.subr.bf16.mxu0 0
        %1711 = vmatpush1.bf16.msra.mxu0 %v1705
        %1712 = vmatprep.subr.bf16.mxu0 0
        %1713 = vmatpush1.bf16.msra.mxu0 0
        %1714 = vmatprep.subr.bf16.mxu0 0
        %1715 = vmatpush1.bf16.msra.mxu0 0
        %1716 = vmatprep.subr.bf16.mxu0 0
        %1717 = vmatpush1.bf16.msra.mxu0 0
        %1718 = vmatprep.subr.bf16.mxu0 0
        %1719 = vmatpush1.bf16.msra.mxu0 0
        %1720 = vmatprep.subr.bf16.mxu0 0
        %1721 = vmatpush1.bf16.msra.mxu0 0
        %1722 = vmatprep.subr.bf16.mxu0 0
        %1723 = vmatpush1.bf16.msra.mxu0 0
        %1724 = vmatprep.subr.bf16.mxu0 0
        %1725 = vmatpush1.bf16.msra.mxu0 0
        %1726 = vmatprep.subr.bf16.mxu0 0
        %1727 = vmatpush1.bf16.msra.mxu0 0
        %1728 = vmatprep.subr.bf16.mxu0 0
        %1729 = vmatpush1.bf16.msra.mxu0 0
        %1730 = vmatprep.subr.bf16.mxu0 0
        %1731 = vmatpush1.bf16.msra.mxu0 0
        %1732 = vmatprep.subr.bf16.mxu0 0
        %1733 = vmatpush1.bf16.msra.mxu0 0
        %1734 = vmatprep.subr.bf16.mxu0 0
        %1735 = vmatpush1.bf16.msra.mxu0 0
        %1736 = vmatprep.subr.bf16.mxu0 0
        %1737 = vmatpush1.bf16.msra.mxu0 0
        %1738 = vmatprep.subr.bf16.mxu0 0
        %1739 = vmatpush1.bf16.msra.mxu0 0
        %1740 = vmatprep.subr.bf16.mxu0 0
        %1741 = vmatpush1.bf16.msra.mxu0 0
        %1742 = vmatprep.mubr.bf16.mxu0 0
        %1743 = vmatmul.mubr.bf16.gmra.mrb[0].mxu0 %v1708
        %v1744 = vpop.f32.mrb[0].mxu0
        %v1745 = vadd.f32 0.0, %v1744
        %v1746 = vpop.f32.mrb[0].mxu0
        %v1747 = vpop.f32.mrb[0].mxu0
        %v1748 = vadd.f32 0.0, %v1747
        %v1749 = vpop.f32.mrb[0].mxu0
        %1750 = vdwg.mxu0
        %1751 = vst.msk [vmem:[#allocation2 + $0x70] sm:$0xff] %vm806, %v1745
        %1752 = vst.msk [vmem:[#allocation2 + $0x78] sm:$0xff] %vm806, %v1748
        %v1753 = vld [vmem:[#allocation2] ss:$8 sm:$0xf]
        %v1754 = vld [vmem:[#allocation2] ss:$8 sm:$0xf0]
        %v1755 = vor.u32 %v1753, %v1754
        %s1756 = scalar_lea.vmem [#allocation2], 64
        %v1757 = vld [vmem:[%s1756] ss:$8 sm:$0xf]
        %v1758 = vld [vmem:[%s1756] ss:$8 sm:$0xf0]
        %v1759 = vor.u32 %v1757, %v1758
        %s1760 = scalar_lea.vmem [#allocation2], 1
        %v1761 = vld [vmem:[%s1760] ss:$8 sm:$0xf]
        %v1762 = vld [vmem:[%s1760] ss:$8 sm:$0xf0]
        %v1763 = vor.u32 %v1761, %v1762
        %s1764 = scalar_lea.vmem [#allocation2], 65
        %v1765 = vld [vmem:[%s1764] ss:$8 sm:$0xf]
        %v1766 = vld [vmem:[%s1764] ss:$8 sm:$0xf0]
        %v1767 = vor.u32 %v1765, %v1766
        %s1768 = scalar_lea.vmem [#allocation2], 2
        %v1769 = vld [vmem:[%s1768] ss:$8 sm:$0xf]
        %v1770 = vld [vmem:[%s1768] ss:$8 sm:$0xf0]
        %v1771 = vor.u32 %v1769, %v1770
        %s1772 = scalar_lea.vmem [#allocation2], 66
        %v1773 = vld [vmem:[%s1772] ss:$8 sm:$0xf]
        %v1774 = vld [vmem:[%s1772] ss:$8 sm:$0xf0]
        %v1775 = vor.u32 %v1773, %v1774
        %s1776 = scalar_lea.vmem [#allocation2], 3
        %v1777 = vld [vmem:[%s1776] ss:$8 sm:$0xf]
        %v1778 = vld [vmem:[%s1776] ss:$8 sm:$0xf0]
        %v1779 = vor.u32 %v1777, %v1778
        %s1780 = scalar_lea.vmem [#allocation2], 67
        %v1781 = vld [vmem:[%s1780] ss:$8 sm:$0xf]
        %v1782 = vld [vmem:[%s1780] ss:$8 sm:$0xf0]
        %v1783 = vor.u32 %v1781, %v1782
        %s1784 = scalar_lea.vmem [#allocation2], 4
        %v1785 = vld [vmem:[%s1784] ss:$8 sm:$0xf]
        %v1786 = vld [vmem:[%s1784] ss:$8 sm:$0xf0]
        %v1787 = vor.u32 %v1785, %v1786
        %s1788 = scalar_lea.vmem [#allocation2], 68
        %v1789 = vld [vmem:[%s1788] ss:$8 sm:$0xf]
        %v1790 = vld [vmem:[%s1788] ss:$8 sm:$0xf0]
        %v1791 = vor.u32 %v1789, %v1790
        %s1792 = scalar_lea.vmem [#allocation2], 5
        %v1793 = vld [vmem:[%s1792] ss:$8 sm:$0xf]
        %v1794 = vld [vmem:[%s1792] ss:$8 sm:$0xf0]
        %v1795 = vor.u32 %v1793, %v1794
        %s1796 = scalar_lea.vmem [#allocation2], 69
        %v1797 = vld [vmem:[%s1796] ss:$8 sm:$0xf]
        %v1798 = vld [vmem:[%s1796] ss:$8 sm:$0xf0]
        %v1799 = vor.u32 %v1797, %v1798
        %s1800 = scalar_lea.vmem [#allocation2], 6
        %v1801 = vld [vmem:[%s1800] ss:$8 sm:$0xf]
        %v1802 = vld [vmem:[%s1800] ss:$8 sm:$0xf0]
        %v1803 = vor.u32 %v1801, %v1802
        %s1804 = scalar_lea.vmem [#allocation2], 70
        %v1805 = vld [vmem:[%s1804] ss:$8 sm:$0xf]
        %v1806 = vld [vmem:[%s1804] ss:$8 sm:$0xf0]
        %v1807 = vor.u32 %v1805, %v1806
        %s1808 = scalar_lea.vmem [#allocation2], 7
        %v1809 = vld [vmem:[%s1808] ss:$8 sm:$0xf]
        %v1810 = vld [vmem:[%s1808] ss:$8 sm:$0xf0]
        %v1811 = vor.u32 %v1809, %v1810
        %s1812 = scalar_lea.vmem [#allocation2], 71
        %v1813 = vld [vmem:[%s1812] ss:$8 sm:$0xf]
        %v1814 = vld [vmem:[%s1812] ss:$8 sm:$0xf0]
        %v1815 = vor.u32 %v1813, %v1814
        %1818 = vrot.lane.b32.xlu0 %v1763, 16
        %v1819 = vpop.permute.xlu0 %1818
        %1820 = vrot.lane.b32.xlu0 %v1767, 16
        %v1821 = vpop.permute.xlu0 %1820
        %1826 = vrot.lane.b32.xlu0 %v1771, 32
        %v1827 = vpop.permute.xlu0 %1826
        %1828 = vrot.lane.b32.xlu0 %v1775, 32
        %v1829 = vpop.permute.xlu0 %1828
        %1834 = vrot.lane.b32.xlu0 %v1779, 48
        %v1835 = vpop.permute.xlu0 %1834
        %1836 = vrot.lane.b32.xlu0 %v1783, 48
        %v1837 = vpop.permute.xlu0 %1836
        %1842 = vrot.lane.b32.xlu0 %v1787, 64
        %v1843 = vpop.permute.xlu0 %1842
        %1844 = vrot.lane.b32.xlu0 %v1791, 64
        %v1845 = vpop.permute.xlu0 %1844
        %1850 = vrot.lane.b32.xlu0 %v1795, 80
        %v1851 = vpop.permute.xlu0 %1850
        %1852 = vrot.lane.b32.xlu0 %v1799, 80
        %v1853 = vpop.permute.xlu0 %1852
        %1858 = vrot.lane.b32.xlu0 %v1803, 96
        %v1859 = vpop.permute.xlu0 %1858
        %1860 = vrot.lane.b32.xlu0 %v1807, 96
        %v1861 = vpop.permute.xlu0 %1860
        %1866 = vrot.lane.b32.xlu0 %v1811, 112
        %v1867 = vpop.permute.xlu0 %1866
        %1868 = vrot.lane.b32.xlu0 %v1815, 112
        %v1869 = vpop.permute.xlu0 %1868
        %v1872 = vsel %vm806, %v1755, %v1819
        %v1873 = vsel %vm806, %v1759, %v1821
        %vm1874 = vcmask 261120
        %v1875 = vsel %vm1874, %v1872, %v1827
        %v1876 = vsel %vm1874, %v1873, %v1829
        %vm1877 = vcmask 392192
        %v1878 = vsel %vm1877, %v1875, %v1835
        %v1879 = vsel %vm1877, %v1876, %v1837
        %vm1880 = vcmask 523264
        %v1881 = vsel %vm1880, %v1878, %v1843
        %v1882 = vsel %vm1880, %v1879, %v1845
        %vm1883 = vcmask 654336
        %v1884 = vsel %vm1883, %v1881, %v1851
        %v1885 = vsel %vm1883, %v1882, %v1853
        %vm1886 = vcmask 785408
        %v1887 = vsel %vm1886, %v1884, %v1859
        %v1888 = vsel %vm1886, %v1885, %v1861
        %vm1889 = vcmask 916480
        %v1890 = vsel %vm1889, %v1887, %v1867
        %v1891 = vsel %vm1889, %v1888, %v1869
        %v1892 = vld [vmem:[#allocation12] sm:$0x1]
        %v1893 = vld [vmem:[#allocation14] sm:$0x1]
        %v1894 = vpack.c.bf16 %v1891, %v1890
        %v1895 = vld [vmem:[#allocation9] sm:$0xf]
        %v1896 = vld [vmem:[#allocation9 + $0x4] sm:$0xf]
        %v1897 = vld [vmem:[#allocation9 + $0x8] sm:$0xf]
        %v1898 = vld [vmem:[#allocation9 + $0xc] sm:$0xf]
        %v1899 = vld [vmem:[#allocation9 + $0x10] sm:$0xf]
        %v1900 = vld [vmem:[#allocation9 + $0x14] sm:$0xf]
        %v1901 = vld [vmem:[#allocation9 + $0x18] sm:$0xf]
        %v1902 = vld [vmem:[#allocation9 + $0x1c] sm:$0xf]
        %v1903 = vld [vmem:[#allocation9 + $0x20] sm:$0xf]
        %v1904 = vld [vmem:[#allocation9 + $0x24] sm:$0xf]
        %v1905 = vld [vmem:[#allocation9 + $0x28] sm:$0xf]
        %v1906 = vld [vmem:[#allocation9 + $0x2c] sm:$0xf]
        %v1907 = vld [vmem:[#allocation9 + $0x30] sm:$0xf]
        %v1908 = vld [vmem:[#allocation9 + $0x34] sm:$0xf]
        %v1909 = vld [vmem:[#allocation9 + $0x38] sm:$0xf]
        %v1910 = vld [vmem:[#allocation9 + $0x3c] sm:$0xf]
        %v1911 = vld [vmem:[#allocation11] sm:$0x1]
        %v1913 = vlaneseq
        %v1914 = vshrl.u32 %v1913, 7
        %v1915 = vsub.s32 0, %v1914
        %v1916 = vrot.slane %v1911, %v1915
        %v1934 = vunpack.c.l.b16 %v1895
        %v1935 = vunpack.c.l.b16 %v1896
        %v1936 = vunpack.c.l.b16 %v1897
        %v1937 = vunpack.c.l.b16 %v1898
        %v1938 = vunpack.c.l.b16 %v1899
        %v1939 = vunpack.c.l.b16 %v1900
        %v1940 = vunpack.c.l.b16 %v1901
        %v1941 = vunpack.c.l.b16 %v1902
        %v1942 = vunpack.c.l.b16 %v1903
        %v1943 = vunpack.c.l.b16 %v1904
        %v1944 = vunpack.c.l.b16 %v1905
        %v1945 = vunpack.c.l.b16 %v1906
        %v1946 = vunpack.c.l.b16 %v1907
        %v1947 = vunpack.c.l.b16 %v1908
        %v1948 = vunpack.c.l.b16 %v1909
        %v1949 = vunpack.c.l.b16 %v1910
        %v1950 = vpack.c.b16 %v1935, %v1934
        %v1951 = vpack.c.b16 %v1937, %v1936
        %v1952 = vpack.c.b16 %v1939, %v1938
        %v1953 = vpack.c.b16 %v1941, %v1940
        %v1954 = vpack.c.b16 %v1943, %v1942
        %v1955 = vpack.c.b16 %v1945, %v1944
        %v1956 = vpack.c.b16 %v1947, %v1946
        %v1957 = vpack.c.b16 %v1949, %v1948
        %1966 = vmatprep.subr.bf16.mxu0 0
        %1967 = vmatpush1.bf16.msra.mxu0 %v1950
        %1968 = vmatprep.subr.bf16.mxu0 0
        %1969 = vmatpush1.bf16.msra.mxu0 %v1951
        %1970 = vmatprep.subr.bf16.mxu0 0
        %1971 = vmatpush1.bf16.msra.mxu0 %v1952
        %1972 = vmatprep.subr.bf16.mxu0 0
        %1973 = vmatpush1.bf16.msra.mxu0 %v1953
        %1974 = vmatprep.subr.bf16.mxu0 0
        %1975 = vmatpush1.bf16.msra.mxu0 %v1954
        %1976 = vmatprep.subr.bf16.mxu0 0
        %1977 = vmatpush1.bf16.msra.mxu0 %v1955
        %1978 = vmatprep.subr.bf16.mxu0 0
        %1979 = vmatpush1.bf16.msra.mxu0 %v1956
        %1980 = vmatprep.subr.bf16.mxu0 0
        %1981 = vmatpush1.bf16.msra.mxu0 %v1957
        %1982 = vmatprep.subr.bf16.mxu0 0
        %1983 = vmatpush1.bf16.msra.mxu0 0
        %1984 = vmatprep.subr.bf16.mxu0 0
        %1985 = vmatpush1.bf16.msra.mxu0 0
        %1986 = vmatprep.subr.bf16.mxu0 0
        %1987 = vmatpush1.bf16.msra.mxu0 0
        %1988 = vmatprep.subr.bf16.mxu0 0
        %1989 = vmatpush1.bf16.msra.mxu0 0
        %1990 = vmatprep.subr.bf16.mxu0 0
        %1991 = vmatpush1.bf16.msra.mxu0 0
        %1992 = vmatprep.subr.bf16.mxu0 0
        %1993 = vmatpush1.bf16.msra.mxu0 0
        %1994 = vmatprep.subr.bf16.mxu0 0
        %1995 = vmatpush1.bf16.msra.mxu0 0
        %1996 = vmatprep.subr.bf16.mxu0 0
        %1997 = vmatpush1.bf16.msra.mxu0 0
        %1998 = vmatprep.mubr.bf16.mxu0 0
        %1999 = vmatmul.mubr.bf16.gmra.mrb[0].mxu0 %v1894
        %v2000 = vpop.f32.mrb[0].mxu0
        %v2001 = vadd.f32 %v1916, %v2000
        %v2002 = vpop.f32.mrb[0].mxu0
        %v2003 = vpop.f32.mrb[0].mxu0
        %v2004 = vadd.f32 %v1916, %v2003
        %v2005 = vpop.f32.mrb[0].mxu0
        %2006 = vdwg.mxu0
        %v2007 = vadd.f32 %v539, %v2001
        %v2008 = vadd.f32 %v540, %v2004
        %2009 = vadd.xlane.f32.xlu0 %v2007
        %v2010 = vpop.xlane.xlu0 %2009
        %2011 = vadd.xlane.f32.xlu0 %v2008
        %v2012 = vpop.xlane.xlu0 %2011
        %v2013 = vrcp.pop 128.0
        %v2014 = vmul.f32 %v2010, %v2013
        %v2015 = vmul.f32 %v2012, %v2013
        %v2016 = vsub.f32 %v2007, %v2014
        %v2017 = vsub.f32 %v2008, %v2015
        %v2018 = vmul.f32 %v2016, %v2016
        %v2019 = vmul.f32 %v2017, %v2017
        %2020 = vadd.xlane.f32.xlu0 %v2018
        %v2021 = vpop.xlane.xlu0 %2020
        %2022 = vadd.xlane.f32.xlu0 %v2019
        %v2023 = vpop.xlane.xlu0 %2022
        %v2024 = vmul.f32 %v2021, %v2013
        %v2025 = vmul.f32 %v2023, %v2013
        %v2026 = vadd.f32 %v2024, 1e-05
        %v2027 = vadd.f32 %v2025, 1e-05
        %v2028 = vrsqrt.pop %v2026
        %v2029 = vrsqrt.pop %v2027
        %v2030 = vmul.f32 %v2016, %v2028
        %v2031 = vmul.f32 %v2017, %v2029
        %v2033 = vlaneseq
        %v2034 = vshrl.u32 %v2033, 7
        %v2035 = vsub.s32 0, %v2034
        %v2036 = vrot.slane %v1892, %v2035
        %v2038 = vmul.f32 %v2030, %v2036
        %v2039 = vmul.f32 %v2031, %v2036
        %v2041 = vlaneseq
        %v2042 = vshrl.u32 %v2041, 7
        %v2043 = vsub.s32 0, %v2042
        %v2044 = vrot.slane %v1893, %v2043
        %v2046 = vadd.f32 %v2038, %v2044
        %v2047 = vadd.f32 %v2039, %v2044
        %v2048 = vpack.c.bf16 %v2047, %v2046
        %v2049 = vld [vmem:[#allocation15] sm:$0xff]
        %v2050 = vld [vmem:[#allocation15 + $0x8] sm:$0xff]
        %v2051 = vld [vmem:[#allocation15 + $0x10] sm:$0xff]
        %v2052 = vld [vmem:[#allocation15 + $0x18] sm:$0xff]
        %v2053 = vld [vmem:[#allocation15 + $0x20] sm:$0xff]
        %v2054 = vld [vmem:[#allocation15 + $0x28] sm:$0xff]
        %v2055 = vld [vmem:[#allocation15 + $0x30] sm:$0xff]
        %v2056 = vld [vmem:[#allocation15 + $0x38] sm:$0xff]
        %v2057 = vld [vmem:[#allocation15 + $0x40] sm:$0xff]
        %v2058 = vld [vmem:[#allocation15 + $0x48] sm:$0xff]
        %v2059 = vld [vmem:[#allocation15 + $0x50] sm:$0xff]
        %v2060 = vld [vmem:[#allocation15 + $0x58] sm:$0xff]
        %v2061 = vld [vmem:[#allocation15 + $0x60] sm:$0xff]
        %v2062 = vld [vmem:[#allocation15 + $0x68] sm:$0xff]
        %v2063 = vld [vmem:[#allocation15 + $0x70] sm:$0xff]
        %v2064 = vld [vmem:[#allocation15 + $0x78] sm:$0xff]
        %v2065 = vld [vmem:[#allocation17] sm:$0x3]
        %v2067 = vlaneseq
        %v2068 = vshrl.u32 %v2067, 7
        %v2069 = vsub.s32 0, %v2068
        %v2070 = vrot.slane %v2065, %v2069
        %v2071 = vlaneseq
        %v2072 = vshrl.u32 %v2071, 7
        %v2073 = vsub.s32 1, %v2072
        %v2074 = vrot.slane %v2065, %v2073
        %v2093 = vunpack.c.l.b16 %v2049
        %v2094 = vunpack.c.h.b16 %v2049
        %v2095 = vunpack.c.l.b16 %v2050
        %v2096 = vunpack.c.h.b16 %v2050
        %v2097 = vunpack.c.l.b16 %v2051
        %v2098 = vunpack.c.h.b16 %v2051
        %v2099 = vunpack.c.l.b16 %v2052
        %v2100 = vunpack.c.h.b16 %v2052
        %v2101 = vunpack.c.l.b16 %v2053
        %v2102 = vunpack.c.h.b16 %v2053
        %v2103 = vunpack.c.l.b16 %v2054
        %v2104 = vunpack.c.h.b16 %v2054
        %v2105 = vunpack.c.l.b16 %v2055
        %v2106 = vunpack.c.h.b16 %v2055
        %v2107 = vunpack.c.l.b16 %v2056
        %v2108 = vunpack.c.h.b16 %v2056
        %v2109 = vunpack.c.l.b16 %v2057
        %v2110 = vunpack.c.h.b16 %v2057
        %v2111 = vunpack.c.l.b16 %v2058
        %v2112 = vunpack.c.h.b16 %v2058
        %v2113 = vunpack.c.l.b16 %v2059
        %v2114 = vunpack.c.h.b16 %v2059
        %v2115 = vunpack.c.l.b16 %v2060
        %v2116 = vunpack.c.h.b16 %v2060
        %v2117 = vunpack.c.l.b16 %v2061
        %v2118 = vunpack.c.h.b16 %v2061
        %v2119 = vunpack.c.l.b16 %v2062
        %v2120 = vunpack.c.h.b16 %v2062
        %v2121 = vunpack.c.l.b16 %v2063
        %v2122 = vunpack.c.h.b16 %v2063
        %v2123 = vunpack.c.l.b16 %v2064
        %v2124 = vunpack.c.h.b16 %v2064
        %v2125 = vpack.c.b16 %v2095, %v2093
        %v2126 = vpack.c.b16 %v2096, %v2094
        %v2127 = vpack.c.b16 %v2099, %v2097
        %v2128 = vpack.c.b16 %v2100, %v2098
        %v2129 = vpack.c.b16 %v2103, %v2101
        %v2130 = vpack.c.b16 %v2104, %v2102
        %v2131 = vpack.c.b16 %v2107, %v2105
        %v2132 = vpack.c.b16 %v2108, %v2106
        %v2133 = vpack.c.b16 %v2111, %v2109
        %v2134 = vpack.c.b16 %v2112, %v2110
        %v2135 = vpack.c.b16 %v2115, %v2113
        %v2136 = vpack.c.b16 %v2116, %v2114
        %v2137 = vpack.c.b16 %v2119, %v2117
        %v2138 = vpack.c.b16 %v2120, %v2118
        %v2139 = vpack.c.b16 %v2123, %v2121
        %v2140 = vpack.c.b16 %v2124, %v2122
        %2157 = vmatprep.subr.bf16.mxu0 %v2126
        %2158 = vmatpush1.bf16.msra.mxu0 %v2125
        %2159 = vmatprep.subr.bf16.mxu0 %v2128
        %2160 = vmatpush1.bf16.msra.mxu0 %v2127
        %2161 = vmatprep.subr.bf16.mxu0 %v2130
        %2162 = vmatpush1.bf16.msra.mxu0 %v2129
        %2163 = vmatprep.subr.bf16.mxu0 %v2132
        %2164 = vmatpush1.bf16.msra.mxu0 %v2131
        %2165 = vmatprep.subr.bf16.mxu0 %v2134
        %2166 = vmatpush1.bf16.msra.mxu0 %v2133
        %2167 = vmatprep.subr.bf16.mxu0 %v2136
        %2168 = vmatpush1.bf16.msra.mxu0 %v2135
        %2169 = vmatprep.subr.bf16.mxu0 %v2138
        %2170 = vmatpush1.bf16.msra.mxu0 %v2137
        %2171 = vmatprep.subr.bf16.mxu0 %v2140
        %2172 = vmatpush1.bf16.msra.mxu0 %v2139
        %2173 = vmatprep.subr.bf16.mxu0 0
        %2174 = vmatpush1.bf16.msra.mxu0 0
        %2175 = vmatprep.subr.bf16.mxu0 0
        %2176 = vmatpush1.bf16.msra.mxu0 0
        %2177 = vmatprep.subr.bf16.mxu0 0
        %2178 = vmatpush1.bf16.msra.mxu0 0
        %2179 = vmatprep.subr.bf16.mxu0 0
        %2180 = vmatpush1.bf16.msra.mxu0 0
        %2181 = vmatprep.subr.bf16.mxu0 0
        %2182 = vmatpush1.bf16.msra.mxu0 0
        %2183 = vmatprep.subr.bf16.mxu0 0
        %2184 = vmatpush1.bf16.msra.mxu0 0
        %2185 = vmatprep.subr.bf16.mxu0 0
        %2186 = vmatpush1.bf16.msra.mxu0 0
        %2187 = vmatprep.subr.bf16.mxu0 0
        %2188 = vmatpush1.bf16.msra.mxu0 0
        %2189 = vmatprep.mubr.bf16.mxu0 0
        %2190 = vmatmul.mubr.bf16.gmra.mrb[0].mxu0 %v2048
        %v2191 = vpop.f32.mrb[0].mxu0
        %v2192 = vadd.f32 %v2070, %v2191
        %v2193 = vpop.f32.mrb[0].mxu0
        %v2194 = vadd.f32 %v2074, %v2193
        %v2195 = vpop.f32.mrb[0].mxu0
        %v2196 = vadd.f32 %v2070, %v2195
        %v2197 = vpop.f32.mrb[0].mxu0
        %v2198 = vadd.f32 %v2074, %v2197
        %2199 = vdwg.mxu0
        %v2200 = vmax.f32 %v2192, 0.0
        %v2201 = vmax.f32 %v2194, 0.0
        %v2202 = vmax.f32 %v2196, 0.0
        %v2203 = vmax.f32 %v2198, 0.0
        %v2204 = vpack.c.bf16 %v2202, %v2200
        %v2205 = vpack.c.bf16 %v2203, %v2201
        %v2206 = vld [vmem:[#allocation18] sm:$0xf]
        %v2207 = vld [vmem:[#allocation18 + $0x4] sm:$0xf]
        %v2208 = vld [vmem:[#allocation18 + $0x8] sm:$0xf]
        %v2209 = vld [vmem:[#allocation18 + $0xc] sm:$0xf]
        %v2210 = vld [vmem:[#allocation18 + $0x10] sm:$0xf]
        %v2211 = vld [vmem:[#allocation18 + $0x14] sm:$0xf]
        %v2212 = vld [vmem:[#allocation18 + $0x18] sm:$0xf]
        %v2213 = vld [vmem:[#allocation18 + $0x1c] sm:$0xf]
        %v2214 = vld [vmem:[#allocation18 + $0x20] sm:$0xf]
        %v2215 = vld [vmem:[#allocation18 + $0x24] sm:$0xf]
        %v2216 = vld [vmem:[#allocation18 + $0x28] sm:$0xf]
        %v2217 = vld [vmem:[#allocation18 + $0x2c] sm:$0xf]
        %v2218 = vld [vmem:[#allocation18 + $0x30] sm:$0xf]
        %v2219 = vld [vmem:[#allocation18 + $0x34] sm:$0xf]
        %v2220 = vld [vmem:[#allocation18 + $0x38] sm:$0xf]
        %v2221 = vld [vmem:[#allocation18 + $0x3c] sm:$0xf]
        %v2222 = vld [vmem:[#allocation18 + $0x40] sm:$0xf]
        %v2223 = vld [vmem:[#allocation18 + $0x44] sm:$0xf]
        %v2224 = vld [vmem:[#allocation18 + $0x48] sm:$0xf]
        %v2225 = vld [vmem:[#allocation18 + $0x4c] sm:$0xf]
        %v2226 = vld [vmem:[#allocation18 + $0x50] sm:$0xf]
        %v2227 = vld [vmem:[#allocation18 + $0x54] sm:$0xf]
        %v2228 = vld [vmem:[#allocation18 + $0x58] sm:$0xf]
        %v2229 = vld [vmem:[#allocation18 + $0x5c] sm:$0xf]
        %v2230 = vld [vmem:[#allocation18 + $0x60] sm:$0xf]
        %v2231 = vld [vmem:[#allocation18 + $0x64] sm:$0xf]
        %v2232 = vld [vmem:[#allocation18 + $0x68] sm:$0xf]
        %v2233 = vld [vmem:[#allocation18 + $0x6c] sm:$0xf]
        %v2234 = vld [vmem:[#allocation18 + $0x70] sm:$0xf]
        %v2235 = vld [vmem:[#allocation18 + $0x74] sm:$0xf]
        %v2236 = vld [vmem:[#allocation18 + $0x78] sm:$0xf]
        %v2237 = vld [vmem:[#allocation18 + $0x7c] sm:$0xf]
        %v2238 = vld [vmem:[#allocation20] sm:$0x1]
        %v2240 = vlaneseq
        %v2241 = vshrl.u32 %v2240, 7
        %v2242 = vsub.s32 0, %v2241
        %v2243 = vrot.slane %v2238, %v2242
        %v2277 = vunpack.c.l.b16 %v2206
        %v2278 = vunpack.c.l.b16 %v2207
        %v2279 = vunpack.c.l.b16 %v2208
        %v2280 = vunpack.c.l.b16 %v2209
        %v2281 = vunpack.c.l.b16 %v2210
        %v2282 = vunpack.c.l.b16 %v2211
        %v2283 = vunpack.c.l.b16 %v2212
        %v2284 = vunpack.c.l.b16 %v2213
        %v2285 = vunpack.c.l.b16 %v2214
        %v2286 = vunpack.c.l.b16 %v2215
        %v2287 = vunpack.c.l.b16 %v2216
        %v2288 = vunpack.c.l.b16 %v2217
        %v2289 = vunpack.c.l.b16 %v2218
        %v2290 = vunpack.c.l.b16 %v2219
        %v2291 = vunpack.c.l.b16 %v2220
        %v2292 = vunpack.c.l.b16 %v2221
        %v2293 = vunpack.c.l.b16 %v2222
        %v2294 = vunpack.c.l.b16 %v2223
        %v2295 = vunpack.c.l.b16 %v2224
        %v2296 = vunpack.c.l.b16 %v2225
        %v2297 = vunpack.c.l.b16 %v2226
        %v2298 = vunpack.c.l.b16 %v2227
        %v2299 = vunpack.c.l.b16 %v2228
        %v2300 = vunpack.c.l.b16 %v2229
        %v2301 = vunpack.c.l.b16 %v2230
        %v2302 = vunpack.c.l.b16 %v2231
        %v2303 = vunpack.c.l.b16 %v2232
        %v2304 = vunpack.c.l.b16 %v2233
        %v2305 = vunpack.c.l.b16 %v2234
        %v2306 = vunpack.c.l.b16 %v2235
        %v2307 = vunpack.c.l.b16 %v2236
        %v2308 = vunpack.c.l.b16 %v2237
        %v2309 = vpack.c.b16 %v2278, %v2277
        %v2310 = vpack.c.b16 %v2280, %v2279
        %v2311 = vpack.c.b16 %v2282, %v2281
        %v2312 = vpack.c.b16 %v2284, %v2283
        %v2313 = vpack.c.b16 %v2286, %v2285
        %v2314 = vpack.c.b16 %v2288, %v2287
        %v2315 = vpack.c.b16 %v2290, %v2289
        %v2316 = vpack.c.b16 %v2292, %v2291
        %v2317 = vpack.c.b16 %v2294, %v2293
        %v2318 = vpack.c.b16 %v2296, %v2295
        %v2319 = vpack.c.b16 %v2298, %v2297
        %v2320 = vpack.c.b16 %v2300, %v2299
        %v2321 = vpack.c.b16 %v2302, %v2301
        %v2322 = vpack.c.b16 %v2304, %v2303
        %v2323 = vpack.c.b16 %v2306, %v2305
        %v2324 = vpack.c.b16 %v2308, %v2307
        %2341 = vmatprep.subr.bf16.mxu0 0
        %2342 = vmatpush1.bf16.msra.mxu0 %v2309
        %2343 = vmatprep.subr.bf16.mxu0 0
        %2344 = vmatpush1.bf16.msra.mxu0 %v2310
        %2345 = vmatprep.subr.bf16.mxu0 0
        %2346 = vmatpush1.bf16.msra.mxu0 %v2311
        %2347 = vmatprep.subr.bf16.mxu0 0
        %2348 = vmatpush1.bf16.msra.mxu0 %v2312
        %2349 = vmatprep.subr.bf16.mxu0 0
        %2350 = vmatpush1.bf16.msra.mxu0 %v2313
        %2351 = vmatprep.subr.bf16.mxu0 0
        %2352 = vmatpush1.bf16.msra.mxu0 %v2314
        %2353 = vmatprep.subr.bf16.mxu0 0
        %2354 = vmatpush1.bf16.msra.mxu0 %v2315
        %2355 = vmatprep.subr.bf16.mxu0 0
        %2356 = vmatpush1.bf16.msra.mxu0 %v2316
        %2357 = vmatprep.subr.bf16.mxu0 0
        %2358 = vmatpush1.bf16.msra.mxu0 %v2317
        %2359 = vmatprep.subr.bf16.mxu0 0
        %2360 = vmatpush1.bf16.msra.mxu0 %v2318
        %2361 = vmatprep.subr.bf16.mxu0 0
        %2362 = vmatpush1.bf16.msra.mxu0 %v2319
        %2363 = vmatprep.subr.bf16.mxu0 0
        %2364 = vmatpush1.bf16.msra.mxu0 %v2320
        %2365 = vmatprep.subr.bf16.mxu0 0
        %2366 = vmatpush1.bf16.msra.mxu0 %v2321
        %2367 = vmatprep.subr.bf16.mxu0 0
        %2368 = vmatpush1.bf16.msra.mxu0 %v2322
        %2369 = vmatprep.subr.bf16.mxu0 0
        %2370 = vmatpush1.bf16.msra.mxu0 %v2323
        %2371 = vmatprep.subr.bf16.mxu0 0
        %2372 = vmatpush1.bf16.msra.mxu0 %v2324
        %2373 = vmatprep.mubr.bf16.mxu0 %v2205
        %2374 = vmatmul.mubr.bf16.gmra.mrb[0].mxu0 %v2204
        %v2375 = vpop.f32.mrb[0].mxu0
        %v2376 = vadd.f32 %v2243, %v2375
        %v2377 = vpop.f32.mrb[0].mxu0
        %v2378 = vpop.f32.mrb[0].mxu0
        %v2379 = vadd.f32 %v2243, %v2378
        %v2380 = vpop.f32.mrb[0].mxu0
        %2381 = vdwg.mxu0
        %v2382 = vadd.f32 %v2046, %v2376
        %v2383 = vadd.f32 %v2047, %v2379
        %2384 = vadd.xlane.f32.xlu0 %v2382
        %v2385 = vpop.xlane.xlu0 %2384
        %2386 = vadd.xlane.f32.xlu0 %v2383
        %v2387 = vpop.xlane.xlu0 %2386
        %v2388 = vmul.f32 %v2385, %v2013
        %v2389 = vmul.f32 %v2387, %v2013
        %v2390 = vsub.f32 %v2382, %v2388
        %v2391 = vsub.f32 %v2383, %v2389
        %v2392 = vmul.f32 %v2390, %v2390
        %v2393 = vmul.f32 %v2391, %v2391
        %2394 = vadd.xlane.f32.xlu0 %v2392
        %v2395 = vpop.xlane.xlu0 %2394
        %2396 = vadd.xlane.f32.xlu0 %v2393
        %v2397 = vpop.xlane.xlu0 %2396
        %v2398 = vmul.f32 %v2395, %v2013
        %v2399 = vmul.f32 %v2397, %v2013
        %v2400 = vadd.f32 %v2398, 1e-05
        %v2401 = vadd.f32 %v2399, 1e-05
        %v2402 = vrsqrt.pop %v2400
        %v2403 = vrsqrt.pop %v2401
        %v2404 = vmul.f32 %v2390, %v2402
        %v2405 = vmul.f32 %v2391, %v2403
        %v2406 = vmul.f32 %v2404, %v2036
        %v2407 = vmul.f32 %v2405, %v2036
        %v2408 = vadd.f32 %v2406, %v2044
        %v2409 = vadd.f32 %v2407, %v2044
        %2410 = vst [vmem:[%s537] sm:$0xff] %v2408
        %2411 = vst [vmem:[%s537 + $0x8] sm:$0xff] %v2409
        %s2412 = sand.u32 %s277, 1
        %s2413 = scalar_lea.sflag [#allocation5], %s2412
        %s2414 = sand.u32 %s277, 1
        %s2415 = smul.addr %s2414, 16
        %s2416 = scalar_lea.vmem [#allocation21], %s2415
        // Predicated region
        $region109: #{encoder_block.1} parent=63 // pred_check
          %p2417 = pneg %p287
        $region110: #{encoder_block.1} parent=63 // pred_check_branch
          %2419 = sbr.rel (%p2417) target = $region112
        $region111: #{encoder_block.1} parent=63 // pred_region
          %s2421 = ssub.s32 256, 256
          %2422 = vsyncadd %s2413, %s2421
          %s2423 = smul.addr %s33, 2
          %s2424 = smul.addr %s2423, 128
          %s2425 = scalar_lea.hbm %s11, %s2424
          %s2426 = sshll.u32 %s2416, 4
          %s2427 = int_to_ptr.vmem [resolvable:$true] %s2426
          %2432 = dma.vmem_to_hbm [thread:$0]  %s2427, 256, %s2425, %s2413, 128, 128, 8
        $region112: #{encoder_block.1} parent=63 // pred_fallthru
          _
      $region64: #{encoder_block.1} parent=5 // pred_fallthru
        _
      %p2433 = scmp.le.s32.totalorder 2, %s28
      // Predicated region
      $region113: #{encoder_block.1} parent=5 // pred_check
        %p2434 = pneg %p2433
      $region114: #{encoder_block.1} parent=5 // pred_check_branch
        %2436 = sbr.rel (%p2434) target = $region116
      $region115: #{encoder_block.1} parent=5 // pred_region
        %s2437 = ssub.s32 %s28, 2
        // Predicated region
        $region117: #{encoder_block.1} parent=115 // pred_check
          %p2438 = pneg %p293
        $region118: #{encoder_block.1} parent=115 // pred_check_branch
          %2440 = sbr.rel (%p2438) target = $region120
        $region119: #{encoder_block.1} parent=115 // pred_region
          %s2441 = sand.u32 %s278, 1
          %s2442 = scalar_lea.sflag [#allocation5], %s2441
          %s2443 = sand.u32 %s278, 1
          %s2444 = smul.addr %s2443, 16
          %s2445 = scalar_lea.vmem [#allocation21], %s2444
          %2446 = dma.done %s2442, 256
        $region120: #{encoder_block.1} parent=115 // pred_fallthru
          _
      $region116: #{encoder_block.1} parent=5 // pred_fallthru
        _
    $region6: #{encoder_block.1} parent=1 // loop_footer
      %s32 = sadd.s32 1, %s28
    $region7: #{encoder_block.1} parent=1 // loop_footer_branch
      %27 = sbr.rel target = $region3
    $region8: #{encoder_block.1} parent=1 // loop_exit
      _
    %2447 = vsyncpa [#allocation4], 1
    %s2448 = scalar_lea.sflag [#allocation4], 1
    %2449 = vsyncpa %s2448, 1
    %2450 = vsyncpa [#allocation7], 1
    %2451 = vsyncpa [#allocation10], 1
    %2452 = vsyncpa [#allocation13], 1
    %2453 = vsyncpa [#allocation16], 1
    %2454 = vsyncpa [#allocation19], 1
    %2455 = vsyncpa [#allocation5], 1
    %s2456 = scalar_lea.sflag [#allocation5], 1
    %2457 = vsyncpa %s2456, 1

</llo_original>
